<compile_context>
chip_gen: v7x
topology: tpu7x:2x2x1
jax: 0.10.0
libtpu: 0.0.40
codegen_flags: <defaults>
</compile_context>

<pallas_src>
import jax
import jax.numpy as jnp
from jax.experimental import pallas as pl
from jax.experimental.pallas import tpu as pltpu

# ---- synthetic constants consistent with the module's forward -------------
OBS_SHAPE = 24                 # feature dim of each observation vector
DCRM_RNN_HIDDENS = 32          # GRU hidden size
ACTIONS_START = 0              # VALID_ACTIONS[0]
ACTIONS_END = 3                # VALID_ACTIONS[-1]
N_ACTIONS = ACTIONS_END - ACTIONS_START + 1      # 4
VALID_BET_LOW = 4
VALID_BET_HIGH = 5
POT_SIZE = 6
N_BET_BUCKETS = 8
BET_BUCKETS = [0.25, 0.5, 0.75, 1.0, 2.0]        # N_BET_BUCKETS - 3 multipliers
NULL_VALUE = -100000.0


def _masked_log_softmax(x, valid):
    """log_softmax over the `valid` columns of a lane-padded [B, 128] slab.

    Matches jax.nn.log_softmax restricted to the valid columns, including the
    all-NULL_VALUE row case (uniform -log(n_valid)).  Invalid columns produce
    garbage values that the wrapper slices off.
    """
    xv = jnp.where(valid, x, NULL_VALUE)
    m = jnp.max(xv, axis=1, keepdims=True)
    e = jnp.exp(jnp.where(valid, x - m, NULL_VALUE))
    return x - m - jnp.log(jnp.sum(e, axis=1, keepdims=True))


def policy_kernel(x_ref, len_ref, last_ref,
                  w_ih_ref, w_hh_ref, b_gi_ref, b_hn_ref,
                  w_head_ref, b_head_ref, buckets_ref,
                  out_ref, gi_ref):
    # x_ref: [T, B, F]   len_ref: [B, 1] i32   last_ref: [B, 128]
    # w_ih_ref: [F, 3*Hp]  w_hh_ref: [Hp, 3*Hp]  (gates at 0 / Hp / 2*Hp)
    # w_head_ref: [Hp, 256] (cols 0:N_ACTIONS actions, 128:128+N_BET_BUCKETS bets)
    T, B, F = x_ref.shape
    Hp = w_hh_ref.shape[0]

    # ---- hoisted input projection: one matmul over all timesteps ----------
    x_all = x_ref[...].reshape(T * B, F)
    gi_all = (jnp.dot(x_all, w_ih_ref[...], preferred_element_type=jnp.float32)
              + b_gi_ref[...])                                      # [T*B, 3Hp]
    gi_ref[...] = gi_all.reshape(T, B, 3 * Hp)

    lens = len_ref[...]                                             # [B, 1]
    w_hh = w_hh_ref[...]                                            # [Hp, 3Hp]
    b_hn = b_hn_ref[...]                                            # [1, 3Hp] (n slot only)

    def step(t, h):
        gi = gi_ref[t]                                              # [B, 3Hp]
        gh = jnp.dot(h, w_hh, preferred_element_type=jnp.float32) + b_hn
        r = jax.nn.sigmoid(gi[:, 0:Hp] + gh[:, 0:Hp])
        z = jax.nn.sigmoid(gi[:, Hp:2 * Hp] + gh[:, Hp:2 * Hp])
        n = jnp.tanh(gi[:, 2 * Hp:3 * Hp] + r * gh[:, 2 * Hp:3 * Hp])
        h_new = (1.0 - z) * n + z * h
        return jnp.where(t < lens, h_new, h)                        # length mask

    h = jax.lax.fori_loop(0, T, step, jnp.zeros((B, Hp), jnp.float32),
                          unroll=True)

    # ---- fused, lane-dense output heads ------------------------------------
    logits = (jnp.dot(h, w_head_ref[...], preferred_element_type=jnp.float32)
              + b_head_ref[...])                                    # [B, 256]
    act_l = logits[:, 0:128]
    bet_l = logits[:, 128:256]

    last = last_ref[...]                                            # [B, 128]
    col = jax.lax.broadcasted_iota(jnp.int32, (B, 128), 1)
    act_valid = col < N_ACTIONS
    bet_valid = col < N_BET_BUCKETS

    # action masking (ACTIONS_START == 0: flag for action j is last[:, j])
    act_l = jnp.where(~act_valid | (last == 0.0), NULL_VALUE, act_l)
    act_live = jnp.any(act_valid & (act_l != NULL_VALUE), axis=1, keepdims=True)
    act_l = jnp.where(~act_live & act_valid, 0.0, act_l)

    # bet-size array: [low, mid, high, BET_BUCKETS * pot, ...]
    vlow = last[:, VALID_BET_LOW:VALID_BET_LOW + 1]                 # [B, 1]
    vhigh = last[:, VALID_BET_HIGH:VALID_BET_HIGH + 1]              # [B, 1]
    vmid = (vlow + vhigh) * 0.5
    pot = last[:, POT_SIZE:POT_SIZE + 1]                            # [B, 1]
    scaled = buckets_ref[...] * pot                                 # [B, 128]
    betsize = jnp.where(col == 0, vlow,
              jnp.where(col == 1, vmid,
              jnp.where(col == 2, vhigh, scaled)))
    bet_l = jnp.where(~bet_valid | (vlow > betsize) | (vhigh < betsize),
                      NULL_VALUE, bet_l)
    bet_live = jnp.any(bet_valid & (bet_l != NULL_VALUE), axis=1, keepdims=True)
    bet_l = jnp.where(~bet_live & bet_valid, 0.0, bet_l)
    bet_invalid = last[:, ACTIONS_START + 2:ACTIONS_START + 3] == 0.0
    bet_l = jnp.where(bet_invalid, NULL_VALUE, bet_l)

    out_ref[:, 0:128] = _masked_log_softmax(act_l, act_valid)
    out_ref[:, 128:256] = _masked_log_softmax(bet_l, bet_valid)


def init_params(key, n_hiddens=DCRM_RNN_HIDDENS):
    ks = jax.random.split(key, 8)
    H, F = n_hiddens, OBS_SHAPE
    s = 1.0 / float(jnp.sqrt(H))
    return {
        "w_ih": jax.random.uniform(ks[0], (3 * H, F), jnp.float32, -s, s),
        "w_hh": jax.random.uniform(ks[1], (3 * H, H), jnp.float32, -s, s),
        "b_ih": jax.random.uniform(ks[2], (3 * H,), jnp.float32, -s, s),
        "b_hh": jax.random.uniform(ks[3], (3 * H,), jnp.float32, -s, s),
        "w_act": jax.random.uniform(ks[4], (N_ACTIONS, H), jnp.float32, -s, s),
        "b_act": jax.random.uniform(ks[5], (N_ACTIONS,), jnp.float32, -s, s),
        "w_bet": jax.random.uniform(ks[6], (N_BET_BUCKETS, H), jnp.float32, -s, s),
        "b_bet": jax.random.uniform(ks[7], (N_BET_BUCKETS,), jnp.float32, -s, s),
    }


@jax.jit
def policy_forward(x, starts, params):
    """x: [B, T, OBS_SHAPE] f32 (batch_first, like PyTorch); starts: [B] int32 lengths."""
    B, T, F = x.shape
    H = params["w_hh"].shape[1]
    Hp = ((H + 127) // 128) * 128                       # lane-padded hidden size
    NA, NB = N_ACTIONS, N_BET_BUCKETS

    # x[b, starts[b]-1, :] gather (glue, same as torch advanced indexing)
    last = x[jnp.arange(B), starts - 1, :]                           # [B, F]

    # batch padding / tiling: >= 8 sublanes, 128-row blocks at scale
    B_BLK = 128 if B >= 128 else ((B + 7) // 8) * 8
    Bp = ((B + B_BLK - 1) // B_BLK) * B_BLK
    pad_b = Bp - B

    x_tm = jnp.pad(jnp.transpose(x, (1, 0, 2)), ((0, 0), (0, pad_b), (0, 0)))
    lens = jnp.pad(starts.astype(jnp.int32), (0, pad_b)).reshape(Bp, 1)
    last_p = jnp.pad(last, ((0, pad_b), (0, 128 - F)))               # [Bp, 128]

    # ---- gate-aligned, lane-padded GRU weights (gates at 0 / Hp / 2Hp) -----
    def pad_gate_cols(w):                      # [rows, 3H] -> [rows, 3*Hp]
        return jnp.concatenate(
            [jnp.pad(w[:, g * H:(g + 1) * H], ((0, 0), (0, Hp - H)))
             for g in range(3)], axis=1)

    w_ih_p = pad_gate_cols(params["w_ih"].T)                                   # [F, 3Hp]
    w_hh_p = pad_gate_cols(jnp.pad(params["w_hh"].T, ((0, Hp - H), (0, 0))))   # [Hp, 3Hp]

    b_ih, b_hh = params["b_ih"], params["b_hh"]
    # fold b_ih + b_hh into the precomputed gi for r/z; n keeps b_hh separate
    b_gi = jnp.concatenate([
        jnp.pad(b_ih[0:H] + b_hh[0:H], (0, Hp - H)),
        jnp.pad(b_ih[H:2 * H] + b_hh[H:2 * H], (0, Hp - H)),
        jnp.pad(b_ih[2 * H:3 * H], (0, Hp - H)),
    ]).reshape(1, 3 * Hp)
    b_hn = jnp.concatenate([
        jnp.zeros((2 * Hp,), jnp.float32),
        jnp.pad(b_hh[2 * H:3 * H], (0, Hp - H)),
    ]).reshape(1, 3 * Hp)

    # ---- fused lane-dense output head: [:, 0:128]=actions, [:, 128:256]=bets
    w_head = jnp.zeros((Hp, 256), jnp.float32)
    w_head = w_head.at[:H, 0:NA].set(params["w_act"].T)
    w_head = w_head.at[:H, 128:128 + NB].set(params["w_bet"].T)
    b_head = jnp.zeros((1, 256), jnp.float32)
    b_head = b_head.at[0, 0:NA].set(params["b_act"])
    b_head = b_head.at[0, 128:128 + NB].set(params["b_bet"])

    buckets_p = jnp.zeros((1, 128), jnp.float32)
    buckets_p = buckets_p.at[0, 3:3 + len(BET_BUCKETS)].set(
        jnp.asarray(BET_BUCKETS, jnp.float32))

    grid = (Bp // B_BLK,)
    out = pl.pallas_call(
        policy_kernel,
        out_shape=jax.ShapeDtypeStruct((Bp, 256), jnp.float32),
        grid_spec=pltpu.PrefetchScalarGridSpec(
            num_scalar_prefetch=0,
            grid=grid,
            in_specs=[
                pl.BlockSpec((T, B_BLK, F), lambda b: (0, b, 0)),      # x (time-major)
                pl.BlockSpec((B_BLK, 1), lambda b: (b, 0)),            # lengths
                pl.BlockSpec((B_BLK, 128), lambda b: (b, 0)),          # last obs (padded)
                pl.BlockSpec((F, 3 * Hp), lambda b: (0, 0)),           # W_ih (padded)
                pl.BlockSpec((Hp, 3 * Hp), lambda b: (0, 0)),          # W_hh (padded)
                pl.BlockSpec((1, 3 * Hp), lambda b: (0, 0)),           # folded gi bias
                pl.BlockSpec((1, 3 * Hp), lambda b: (0, 0)),           # b_hn (n gate)
                pl.BlockSpec((Hp, 256), lambda b: (0, 0)),             # fused head W
                pl.BlockSpec((1, 256), lambda b: (0, 0)),              # fused head b
                pl.BlockSpec((1, 128), lambda b: (0, 0)),              # bet buckets
            ],
            out_specs=pl.BlockSpec((B_BLK, 256), lambda b: (b, 0)),
            scratch_shapes=[pltpu.VMEM((T, B_BLK, 3 * Hp), jnp.float32)],
        ),
        compiler_params=pltpu.CompilerParams(
            dimension_semantics=("parallel",)),
    )(x_tm, lens, last_p, w_ih_p, w_hh_p, b_gi, b_hn, w_head, b_head, buckets_p)

    return out[:B, 0:NA], out[:B, 128:128 + NB]


def reference_forward(x, starts, params):
    """Pure-JAX reference replicating the PyTorch forward (log_softmax branch)."""
    B, T, F = x.shape
    H = params["w_hh"].shape[1]
    h = jnp.zeros((B, H), jnp.float32)
    w_ih_t, w_hh_t = params["w_ih"].T, params["w_hh"].T
    for t in range(T):
        x_t = x[:, t, :]
        gi = x_t @ w_ih_t + params["b_ih"]
        gh = h @ w_hh_t + params["b_hh"]
        r = jax.nn.sigmoid(gi[:, :H] + gh[:, :H])
        z = jax.nn.sigmoid(gi[:, H:2 * H] + gh[:, H:2 * H])
        n = jnp.tanh(gi[:, 2 * H:] + r * gh[:, 2 * H:])
        h_new = (1.0 - z) * n + z * h
        active = (t < starts).astype(jnp.float32)[:, None]
        h = active * h_new + (1.0 - active) * h
    act = h @ params["w_act"].T + params["b_act"]
    bet = h @ params["w_bet"].T + params["b_bet"]
    last = x[jnp.arange(B), starts - 1, :]
    inv = last[:, ACTIONS_START:ACTIONS_END + 1] == 0.0
    vlow = last[:, VALID_BET_LOW][:, None]
    vhigh = last[:, VALID_BET_HIGH][:, None]
    vmid = (vlow + vhigh) / 2.0
    pot = last[:, POT_SIZE][:, None]
    act = jnp.where(inv, NULL_VALUE, act)
    act = jnp.where(jnp.all(act == NULL_VALUE, axis=1, keepdims=True), 0.0, act)
    betsize = jnp.concatenate(
        [vlow, vmid, vhigh, jnp.asarray(BET_BUCKETS, jnp.float32)[None, :] * pot], axis=1)
    bet = jnp.where((vlow > betsize) | (vhigh < betsize), NULL_VALUE, bet)
    bet = jnp.where(jnp.all(bet == NULL_VALUE, axis=1, keepdims=True), 0.0, bet)
    bet = jnp.where(inv[:, 2:3], NULL_VALUE, bet)
    return jax.nn.log_softmax(act, axis=1), jax.nn.log_softmax(bet, axis=1)


if __name__ == "__main__":
    key = jax.random.PRNGKey(0)
    kp, kx, ka, kb = jax.random.split(key, 4)
    params = init_params(kp)

    B, T = 2, 8
    x = jax.random.normal(kx, (B, T, OBS_SHAPE), jnp.float32)
    # action-validity slots are 0/1 flags
    flags = (jax.random.uniform(ka, (B, T, N_ACTIONS)) > 0.4).astype(jnp.float32)
    x = x.at[:, :, ACTIONS_START:ACTIONS_END + 1].set(flags)
    # positive bet range (low < high) and pot size features
    low = jax.random.uniform(kb, (B, T), minval=1.0, maxval=5.0)
    x = x.at[:, :, VALID_BET_LOW].set(low)
    x = x.at[:, :, VALID_BET_HIGH].set(low + 10.0)
    x = x.at[:, :, POT_SIZE].set(6.0)
    starts = jnp.array([T, 5], dtype=jnp.int32)   # variable sequence lengths

    act_lp, bet_lp = policy_forward(x, starts, params)
    jax.block_until_ready((act_lp, bet_lp))

    ref_act, ref_bet = reference_forward(x, starts, params)
    assert act_lp.shape == (B, N_ACTIONS) and bet_lp.shape == (B, N_BET_BUCKETS)
    assert jnp.allclose(act_lp, ref_act, rtol=1e-3, atol=1e-2), "action log-prob mismatch"
    assert jnp.allclose(bet_lp, ref_bet, rtol=1e-3, atol=1e-2), "bet log-prob mismatch"
    print("KERNEL_OK")
</pallas_src>

<mosaic_0001>
module attributes {stable_mosaic.version = 11 : i64} {
  func.func @policy_kernel(%arg0: i32, %arg1: memref<8x8x24xf32, #tpu.memory_space<vmem>>, %arg2: memref<8x1xi32, #tpu.memory_space<vmem>>, %arg3: memref<8x128xf32, #tpu.memory_space<vmem>>, %arg4: memref<24x384xf32, #tpu.memory_space<vmem>>, %arg5: memref<128x384xf32, #tpu.memory_space<vmem>>, %arg6: memref<1x384xf32, #tpu.memory_space<vmem>>, %arg7: memref<1x384xf32, #tpu.memory_space<vmem>>, %arg8: memref<128x256xf32, #tpu.memory_space<vmem>>, %arg9: memref<1x256xf32, #tpu.memory_space<vmem>>, %arg10: memref<1x128xf32, #tpu.memory_space<vmem>>, %arg11: memref<8x256xf32, #tpu.memory_space<vmem>>, %arg12: memref<8x8x384xf32, #tpu.memory_space<vmem>>) attributes {dimension_semantics = [#tpu.dimension_semantics<parallel>], iteration_bounds = array<i64: 1>, scalar_prefetch = 0 : i64, scratch_operands = 1 : i64, tpu.core_type = #tpu.core_type<tc>, window_params = [{transform_indices = @transform_0, window_bounds = array<i64: 8, 8, 24>}, {transform_indices = @transform_1, window_bounds = array<i64: 8, 1>}, {transform_indices = @transform_2, window_bounds = array<i64: 8, 128>}, {pipeline_mode = #tpu.pipeline_mode<synchronous>, transform_indices = @transform_3, window_bounds = array<i64: 24, 384>}, {pipeline_mode = #tpu.pipeline_mode<synchronous>, transform_indices = @transform_4, window_bounds = array<i64: 128, 384>}, {pipeline_mode = #tpu.pipeline_mode<synchronous>, transform_indices = @transform_5, window_bounds = array<i64: 1, 384>}, {pipeline_mode = #tpu.pipeline_mode<synchronous>, transform_indices = @transform_6, window_bounds = array<i64: 1, 384>}, {pipeline_mode = #tpu.pipeline_mode<synchronous>, transform_indices = @transform_7, window_bounds = array<i64: 128, 256>}, {pipeline_mode = #tpu.pipeline_mode<synchronous>, transform_indices = @transform_8, window_bounds = array<i64: 1, 256>}, {pipeline_mode = #tpu.pipeline_mode<synchronous>, transform_indices = @transform_9, window_bounds = array<i64: 1, 128>}, {transform_indices = @transform_10, window_bounds = array<i64: 8, 256>}]} {
    %c0 = arith.constant 0 : index
    %c0_0 = arith.constant 0 : index
    %c0_1 = arith.constant 0 : index
    %0 = vector.load %arg1[%c0, %c0_0, %c0_1] : memref<8x8x24xf32, #tpu.memory_space<vmem>>, vector<8x8x24xf32>
    %1 = vector.shape_cast %0 : vector<8x8x24xf32> to vector<64x24xf32>
    %c0_2 = arith.constant 0 : index
    %c0_3 = arith.constant 0 : index
    %2 = vector.load %arg4[%c0_2, %c0_3] : memref<24x384xf32, #tpu.memory_space<vmem>>, vector<24x384xf32>
    %cst = arith.constant dense<0.000000e+00> : vector<64x384xf32>
    %3 = tpu.matmul %1, %2, %cst {dimension_numbers = #tpu.dot_dimension_numbers<[1], [0], [0], [1], [0, 0, 1, 1], [], []>} : vector<64x24xf32>, vector<24x384xf32>, vector<64x384xf32> -> vector<64x384xf32>
    %c0_4 = arith.constant 0 : index
    %c0_5 = arith.constant 0 : index
    %4 = vector.load %arg6[%c0_4, %c0_5] : memref<1x384xf32, #tpu.memory_space<vmem>>, vector<1x384xf32>
    %5 = vector.broadcast %4 : vector<1x384xf32> to vector<64x384xf32>
    %6 = arith.addf %3, %5 : vector<64x384xf32>
    %7 = vector.shape_cast %6 : vector<64x384xf32> to vector<8x8x384xf32>
    %c0_6 = arith.constant 0 : index
    %c0_7 = arith.constant 0 : index
    %c0_8 = arith.constant 0 : index
    %8 = vector.load %arg12[%c0_6, %c0_7, %c0_8] : memref<8x8x384xf32, #tpu.memory_space<vmem>>, vector<8x8x384xf32>
    tpu.vector_store %arg12[%c0_6, %c0_7, %c0_8], %7 {strides = array<i32>} : memref<8x8x384xf32, #tpu.memory_space<vmem>>, vector<8x8x384xf32>,
    %c0_9 = arith.constant 0 : index
    %c0_10 = arith.constant 0 : index
    %9 = vector.load %arg2[%c0_9, %c0_10] : memref<8x1xi32, #tpu.memory_space<vmem>>, vector<8x1xi32>
    %c0_11 = arith.constant 0 : index
    %c0_12 = arith.constant 0 : index
    %10 = vector.load %arg5[%c0_11, %c0_12] : memref<128x384xf32, #tpu.memory_space<vmem>>, vector<128x384xf32>
    %c0_13 = arith.constant 0 : index
    %c0_14 = arith.constant 0 : index
    %11 = vector.load %arg7[%c0_13, %c0_14] : memref<1x384xf32, #tpu.memory_space<vmem>>, vector<1x384xf32>
    %cst_15 = arith.constant 0.000000e+00 : f32
    %12 = vector.broadcast %cst_15 : f32 to vector<8x128xf32>
    %c0_i32 = arith.constant 0 : i32
    %13 = arith.index_cast %c0_i32 : i32 to index
    %c0_16 = arith.constant 0 : index
    %c0_17 = arith.constant 0 : index
    %14 = vector.load %arg12[%13, %c0_16, %c0_17] : memref<8x8x384xf32, #tpu.memory_space<vmem>>, vector<1x8x384xf32>
    %15 = vector.shape_cast %14 : vector<1x8x384xf32> to vector<8x384xf32>
    %cst_18 = arith.constant dense<0.000000e+00> : vector<8x384xf32>
    %16 = tpu.matmul %12, %10, %cst_18 {dimension_numbers = #tpu.dot_dimension_numbers<[1], [0], [0], [1], [0, 0, 1, 1], [], []>} : vector<8x128xf32>, vector<128x384xf32>, vector<8x384xf32> -> vector<8x384xf32>
    %17 = vector.broadcast %11 : vector<1x384xf32> to vector<8x384xf32>
    %18 = arith.addf %16, %17 : vector<8x384xf32>
    %19 = vector.extract_strided_slice %15 {offsets = [0, 0], sizes = [8, 128], strides = [1, 1]} : vector<8x384xf32> to vector<8x128xf32>
    %20 = vector.extract_strided_slice %18 {offsets = [0, 0], sizes = [8, 128], strides = [1, 1]} : vector<8x384xf32> to vector<8x128xf32>
    %21 = arith.addf %19, %20 : vector<8x128xf32>
    %22 = arith.negf %21 : vector<8x128xf32>
    %23 = math.exp %22 : vector<8x128xf32>
    %cst_19 = arith.constant 1.000000e+00 : f32
    %24 = vector.broadcast %cst_19 : f32 to vector<8x128xf32>
    %25 = arith.addf %24, %23 : vector<8x128xf32>
    %26 = arith.divf %24, %25 : vector<8x128xf32>
    %27 = vector.extract_strided_slice %15 {offsets = [0, 128], sizes = [8, 128], strides = [1, 1]} : vector<8x384xf32> to vector<8x128xf32>
    %28 = vector.extract_strided_slice %18 {offsets = [0, 128], sizes = [8, 128], strides = [1, 1]} : vector<8x384xf32> to vector<8x128xf32>
    %29 = arith.addf %27, %28 : vector<8x128xf32>
    %30 = arith.negf %29 : vector<8x128xf32>
    %31 = math.exp %30 : vector<8x128xf32>
    %cst_20 = arith.constant 1.000000e+00 : f32
    %32 = vector.broadcast %cst_20 : f32 to vector<8x128xf32>
    %33 = arith.addf %32, %31 : vector<8x128xf32>
    %34 = arith.divf %32, %33 : vector<8x128xf32>
    %35 = vector.extract_strided_slice %15 {offsets = [0, 256], sizes = [8, 128], strides = [1, 1]} : vector<8x384xf32> to vector<8x128xf32>
    %36 = vector.extract_strided_slice %18 {offsets = [0, 256], sizes = [8, 128], strides = [1, 1]} : vector<8x384xf32> to vector<8x128xf32>
    %37 = arith.mulf %26, %36 : vector<8x128xf32>
    %38 = arith.addf %35, %37 : vector<8x128xf32>
    %39 = math.tanh %38 : vector<8x128xf32>
    %cst_21 = arith.constant 1.000000e+00 : f32
    %40 = vector.broadcast %cst_21 : f32 to vector<8x128xf32>
    %41 = arith.subf %40, %34 : vector<8x128xf32>
    %42 = arith.mulf %41, %39 : vector<8x128xf32>
    %43 = arith.mulf %34, %12 : vector<8x128xf32>
    %44 = arith.addf %42, %43 : vector<8x128xf32>
    %45 = vector.broadcast %c0_i32 : i32 to vector<8x1xi32>
    %46 = arith.cmpi slt, %45, %9 : vector<8x1xi32>
    %47 = vector.shape_cast %46 : vector<8x1xi1> to vector<8x1xi1>
    %48 = vector.broadcast %47 : vector<8x1xi1> to vector<8x128xi1>
    %49 = arith.select %48, %44, %12 : vector<8x128xi1>, vector<8x128xf32>
    %c1_i32 = arith.constant 1 : i32
    %50 = arith.index_cast %c1_i32 : i32 to index
    %c0_22 = arith.constant 0 : index
    %c0_23 = arith.constant 0 : index
    %51 = vector.load %arg12[%50, %c0_22, %c0_23] : memref<8x8x384xf32, #tpu.memory_space<vmem>>, vector<1x8x384xf32>
    %52 = vector.shape_cast %51 : vector<1x8x384xf32> to vector<8x384xf32>
    %cst_24 = arith.constant dense<0.000000e+00> : vector<8x384xf32>
    %53 = tpu.matmul %49, %10, %cst_24 {dimension_numbers = #tpu.dot_dimension_numbers<[1], [0], [0], [1], [0, 0, 1, 1], [], []>} : vector<8x128xf32>, vector<128x384xf32>, vector<8x384xf32> -> vector<8x384xf32>
    %54 = vector.broadcast %11 : vector<1x384xf32> to vector<8x384xf32>
    %55 = arith.addf %53, %54 : vector<8x384xf32>
    %56 = vector.extract_strided_slice %52 {offsets = [0, 0], sizes = [8, 128], strides = [1, 1]} : vector<8x384xf32> to vector<8x128xf32>
    %57 = vector.extract_strided_slice %55 {offsets = [0, 0], sizes = [8, 128], strides = [1, 1]} : vector<8x384xf32> to vector<8x128xf32>
    %58 = arith.addf %56, %57 : vector<8x128xf32>
    %59 = arith.negf %58 : vector<8x128xf32>
    %60 = math.exp %59 : vector<8x128xf32>
    %cst_25 = arith.constant 1.000000e+00 : f32
    %61 = vector.broadcast %cst_25 : f32 to vector<8x128xf32>
    %62 = arith.addf %61, %60 : vector<8x128xf32>
    %63 = arith.divf %61, %62 : vector<8x128xf32>
    %64 = vector.extract_strided_slice %52 {offsets = [0, 128], sizes = [8, 128], strides = [1, 1]} : vector<8x384xf32> to vector<8x128xf32>
    %65 = vector.extract_strided_slice %55 {offsets = [0, 128], sizes = [8, 128], strides = [1, 1]} : vector<8x384xf32> to vector<8x128xf32>
    %66 = arith.addf %64, %65 : vector<8x128xf32>
    %67 = arith.negf %66 : vector<8x128xf32>
    %68 = math.exp %67 : vector<8x128xf32>
    %cst_26 = arith.constant 1.000000e+00 : f32
    %69 = vector.broadcast %cst_26 : f32 to vector<8x128xf32>
    %70 = arith.addf %69, %68 : vector<8x128xf32>
    %71 = arith.divf %69, %70 : vector<8x128xf32>
    %72 = vector.extract_strided_slice %52 {offsets = [0, 256], sizes = [8, 128], strides = [1, 1]} : vector<8x384xf32> to vector<8x128xf32>
    %73 = vector.extract_strided_slice %55 {offsets = [0, 256], sizes = [8, 128], strides = [1, 1]} : vector<8x384xf32> to vector<8x128xf32>
    %74 = arith.mulf %63, %73 : vector<8x128xf32>
    %75 = arith.addf %72, %74 : vector<8x128xf32>
    %76 = math.tanh %75 : vector<8x128xf32>
    %cst_27 = arith.constant 1.000000e+00 : f32
    %77 = vector.broadcast %cst_27 : f32 to vector<8x128xf32>
    %78 = arith.subf %77, %71 : vector<8x128xf32>
    %79 = arith.mulf %78, %76 : vector<8x128xf32>
    %80 = arith.mulf %71, %49 : vector<8x128xf32>
    %81 = arith.addf %79, %80 : vector<8x128xf32>
    %82 = vector.broadcast %c1_i32 : i32 to vector<8x1xi32>
    %83 = arith.cmpi slt, %82, %9 : vector<8x1xi32>
    %84 = vector.shape_cast %83 : vector<8x1xi1> to vector<8x1xi1>
    %85 = vector.broadcast %84 : vector<8x1xi1> to vector<8x128xi1>
    %86 = arith.select %85, %81, %49 : vector<8x128xi1>, vector<8x128xf32>
    %c2_i32 = arith.constant 2 : i32
    %87 = arith.index_cast %c2_i32 : i32 to index
    %c0_28 = arith.constant 0 : index
    %c0_29 = arith.constant 0 : index
    %88 = vector.load %arg12[%87, %c0_28, %c0_29] : memref<8x8x384xf32, #tpu.memory_space<vmem>>, vector<1x8x384xf32>
    %89 = vector.shape_cast %88 : vector<1x8x384xf32> to vector<8x384xf32>
    %cst_30 = arith.constant dense<0.000000e+00> : vector<8x384xf32>
    %90 = tpu.matmul %86, %10, %cst_30 {dimension_numbers = #tpu.dot_dimension_numbers<[1], [0], [0], [1], [0, 0, 1, 1], [], []>} : vector<8x128xf32>, vector<128x384xf32>, vector<8x384xf32> -> vector<8x384xf32>
    %91 = vector.broadcast %11 : vector<1x384xf32> to vector<8x384xf32>
    %92 = arith.addf %90, %91 : vector<8x384xf32>
    %93 = vector.extract_strided_slice %89 {offsets = [0, 0], sizes = [8, 128], strides = [1, 1]} : vector<8x384xf32> to vector<8x128xf32>
    %94 = vector.extract_strided_slice %92 {offsets = [0, 0], sizes = [8, 128], strides = [1, 1]} : vector<8x384xf32> to vector<8x128xf32>
    %95 = arith.addf %93, %94 : vector<8x128xf32>
    %96 = arith.negf %95 : vector<8x128xf32>
    %97 = math.exp %96 : vector<8x128xf32>
    %cst_31 = arith.constant 1.000000e+00 : f32
    %98 = vector.broadcast %cst_31 : f32 to vector<8x128xf32>
    %99 = arith.addf %98, %97 : vector<8x128xf32>
    %100 = arith.divf %98, %99 : vector<8x128xf32>
    %101 = vector.extract_strided_slice %89 {offsets = [0, 128], sizes = [8, 128], strides = [1, 1]} : vector<8x384xf32> to vector<8x128xf32>
    %102 = vector.extract_strided_slice %92 {offsets = [0, 128], sizes = [8, 128], strides = [1, 1]} : vector<8x384xf32> to vector<8x128xf32>
    %103 = arith.addf %101, %102 : vector<8x128xf32>
    %104 = arith.negf %103 : vector<8x128xf32>
    %105 = math.exp %104 : vector<8x128xf32>
    %cst_32 = arith.constant 1.000000e+00 : f32
    %106 = vector.broadcast %cst_32 : f32 to vector<8x128xf32>
    %107 = arith.addf %106, %105 : vector<8x128xf32>
    %108 = arith.divf %106, %107 : vector<8x128xf32>
    %109 = vector.extract_strided_slice %89 {offsets = [0, 256], sizes = [8, 128], strides = [1, 1]} : vector<8x384xf32> to vector<8x128xf32>
    %110 = vector.extract_strided_slice %92 {offsets = [0, 256], sizes = [8, 128], strides = [1, 1]} : vector<8x384xf32> to vector<8x128xf32>
    %111 = arith.mulf %100, %110 : vector<8x128xf32>
    %112 = arith.addf %109, %111 : vector<8x128xf32>
    %113 = math.tanh %112 : vector<8x128xf32>
    %cst_33 = arith.constant 1.000000e+00 : f32
    %114 = vector.broadcast %cst_33 : f32 to vector<8x128xf32>
    %115 = arith.subf %114, %108 : vector<8x128xf32>
    %116 = arith.mulf %115, %113 : vector<8x128xf32>
    %117 = arith.mulf %108, %86 : vector<8x128xf32>
    %118 = arith.addf %116, %117 : vector<8x128xf32>
    %119 = vector.broadcast %c2_i32 : i32 to vector<8x1xi32>
    %120 = arith.cmpi slt, %119, %9 : vector<8x1xi32>
    %121 = vector.shape_cast %120 : vector<8x1xi1> to vector<8x1xi1>
    %122 = vector.broadcast %121 : vector<8x1xi1> to vector<8x128xi1>
    %123 = arith.select %122, %118, %86 : vector<8x128xi1>, vector<8x128xf32>
    %c3_i32 = arith.constant 3 : i32
    %124 = arith.index_cast %c3_i32 : i32 to index
    %c0_34 = arith.constant 0 : index
    %c0_35 = arith.constant 0 : index
    %125 = vector.load %arg12[%124, %c0_34, %c0_35] : memref<8x8x384xf32, #tpu.memory_space<vmem>>, vector<1x8x384xf32>
    %126 = vector.shape_cast %125 : vector<1x8x384xf32> to vector<8x384xf32>
    %cst_36 = arith.constant dense<0.000000e+00> : vector<8x384xf32>
    %127 = tpu.matmul %123, %10, %cst_36 {dimension_numbers = #tpu.dot_dimension_numbers<[1], [0], [0], [1], [0, 0, 1, 1], [], []>} : vector<8x128xf32>, vector<128x384xf32>, vector<8x384xf32> -> vector<8x384xf32>
    %128 = vector.broadcast %11 : vector<1x384xf32> to vector<8x384xf32>
    %129 = arith.addf %127, %128 : vector<8x384xf32>
    %130 = vector.extract_strided_slice %126 {offsets = [0, 0], sizes = [8, 128], strides = [1, 1]} : vector<8x384xf32> to vector<8x128xf32>
    %131 = vector.extract_strided_slice %129 {offsets = [0, 0], sizes = [8, 128], strides = [1, 1]} : vector<8x384xf32> to vector<8x128xf32>
    %132 = arith.addf %130, %131 : vector<8x128xf32>
    %133 = arith.negf %132 : vector<8x128xf32>
    %134 = math.exp %133 : vector<8x128xf32>
    %cst_37 = arith.constant 1.000000e+00 : f32
    %135 = vector.broadcast %cst_37 : f32 to vector<8x128xf32>
    %136 = arith.addf %135, %134 : vector<8x128xf32>
    %137 = arith.divf %135, %136 : vector<8x128xf32>
    %138 = vector.extract_strided_slice %126 {offsets = [0, 128], sizes = [8, 128], strides = [1, 1]} : vector<8x384xf32> to vector<8x128xf32>
    %139 = vector.extract_strided_slice %129 {offsets = [0, 128], sizes = [8, 128], strides = [1, 1]} : vector<8x384xf32> to vector<8x128xf32>
    %140 = arith.addf %138, %139 : vector<8x128xf32>
    %141 = arith.negf %140 : vector<8x128xf32>
    %142 = math.exp %141 : vector<8x128xf32>
    %cst_38 = arith.constant 1.000000e+00 : f32
    %143 = vector.broadcast %cst_38 : f32 to vector<8x128xf32>
    %144 = arith.addf %143, %142 : vector<8x128xf32>
    %145 = arith.divf %143, %144 : vector<8x128xf32>
    %146 = vector.extract_strided_slice %126 {offsets = [0, 256], sizes = [8, 128], strides = [1, 1]} : vector<8x384xf32> to vector<8x128xf32>
    %147 = vector.extract_strided_slice %129 {offsets = [0, 256], sizes = [8, 128], strides = [1, 1]} : vector<8x384xf32> to vector<8x128xf32>
    %148 = arith.mulf %137, %147 : vector<8x128xf32>
    %149 = arith.addf %146, %148 : vector<8x128xf32>
    %150 = math.tanh %149 : vector<8x128xf32>
    %cst_39 = arith.constant 1.000000e+00 : f32
    %151 = vector.broadcast %cst_39 : f32 to vector<8x128xf32>
    %152 = arith.subf %151, %145 : vector<8x128xf32>
    %153 = arith.mulf %152, %150 : vector<8x128xf32>
    %154 = arith.mulf %145, %123 : vector<8x128xf32>
    %155 = arith.addf %153, %154 : vector<8x128xf32>
    %156 = vector.broadcast %c3_i32 : i32 to vector<8x1xi32>
    %157 = arith.cmpi slt, %156, %9 : vector<8x1xi32>
    %158 = vector.shape_cast %157 : vector<8x1xi1> to vector<8x1xi1>
    %159 = vector.broadcast %158 : vector<8x1xi1> to vector<8x128xi1>
    %160 = arith.select %159, %155, %123 : vector<8x128xi1>, vector<8x128xf32>
    %c4_i32 = arith.constant 4 : i32
    %161 = arith.index_cast %c4_i32 : i32 to index
    %c0_40 = arith.constant 0 : index
    %c0_41 = arith.constant 0 : index
    %162 = vector.load %arg12[%161, %c0_40, %c0_41] : memref<8x8x384xf32, #tpu.memory_space<vmem>>, vector<1x8x384xf32>
    %163 = vector.shape_cast %162 : vector<1x8x384xf32> to vector<8x384xf32>
    %cst_42 = arith.constant dense<0.000000e+00> : vector<8x384xf32>
    %164 = tpu.matmul %160, %10, %cst_42 {dimension_numbers = #tpu.dot_dimension_numbers<[1], [0], [0], [1], [0, 0, 1, 1], [], []>} : vector<8x128xf32>, vector<128x384xf32>, vector<8x384xf32> -> vector<8x384xf32>
    %165 = vector.broadcast %11 : vector<1x384xf32> to vector<8x384xf32>
    %166 = arith.addf %164, %165 : vector<8x384xf32>
    %167 = vector.extract_strided_slice %163 {offsets = [0, 0], sizes = [8, 128], strides = [1, 1]} : vector<8x384xf32> to vector<8x128xf32>
    %168 = vector.extract_strided_slice %166 {offsets = [0, 0], sizes = [8, 128], strides = [1, 1]} : vector<8x384xf32> to vector<8x128xf32>
    %169 = arith.addf %167, %168 : vector<8x128xf32>
    %170 = arith.negf %169 : vector<8x128xf32>
    %171 = math.exp %170 : vector<8x128xf32>
    %cst_43 = arith.constant 1.000000e+00 : f32
    %172 = vector.broadcast %cst_43 : f32 to vector<8x128xf32>
    %173 = arith.addf %172, %171 : vector<8x128xf32>
    %174 = arith.divf %172, %173 : vector<8x128xf32>
    %175 = vector.extract_strided_slice %163 {offsets = [0, 128], sizes = [8, 128], strides = [1, 1]} : vector<8x384xf32> to vector<8x128xf32>
    %176 = vector.extract_strided_slice %166 {offsets = [0, 128], sizes = [8, 128], strides = [1, 1]} : vector<8x384xf32> to vector<8x128xf32>
    %177 = arith.addf %175, %176 : vector<8x128xf32>
    %178 = arith.negf %177 : vector<8x128xf32>
    %179 = math.exp %178 : vector<8x128xf32>
    %cst_44 = arith.constant 1.000000e+00 : f32
    %180 = vector.broadcast %cst_44 : f32 to vector<8x128xf32>
    %181 = arith.addf %180, %179 : vector<8x128xf32>
    %182 = arith.divf %180, %181 : vector<8x128xf32>
    %183 = vector.extract_strided_slice %163 {offsets = [0, 256], sizes = [8, 128], strides = [1, 1]} : vector<8x384xf32> to vector<8x128xf32>
    %184 = vector.extract_strided_slice %166 {offsets = [0, 256], sizes = [8, 128], strides = [1, 1]} : vector<8x384xf32> to vector<8x128xf32>
    %185 = arith.mulf %174, %184 : vector<8x128xf32>
    %186 = arith.addf %183, %185 : vector<8x128xf32>
    %187 = math.tanh %186 : vector<8x128xf32>
    %cst_45 = arith.constant 1.000000e+00 : f32
    %188 = vector.broadcast %cst_45 : f32 to vector<8x128xf32>
    %189 = arith.subf %188, %182 : vector<8x128xf32>
    %190 = arith.mulf %189, %187 : vector<8x128xf32>
    %191 = arith.mulf %182, %160 : vector<8x128xf32>
    %192 = arith.addf %190, %191 : vector<8x128xf32>
    %193 = vector.broadcast %c4_i32 : i32 to vector<8x1xi32>
    %194 = arith.cmpi slt, %193, %9 : vector<8x1xi32>
    %195 = vector.shape_cast %194 : vector<8x1xi1> to vector<8x1xi1>
    %196 = vector.broadcast %195 : vector<8x1xi1> to vector<8x128xi1>
    %197 = arith.select %196, %192, %160 : vector<8x128xi1>, vector<8x128xf32>
    %c5_i32 = arith.constant 5 : i32
    %198 = arith.index_cast %c5_i32 : i32 to index
    %c0_46 = arith.constant 0 : index
    %c0_47 = arith.constant 0 : index
    %199 = vector.load %arg12[%198, %c0_46, %c0_47] : memref<8x8x384xf32, #tpu.memory_space<vmem>>, vector<1x8x384xf32>
    %200 = vector.shape_cast %199 : vector<1x8x384xf32> to vector<8x384xf32>
    %cst_48 = arith.constant dense<0.000000e+00> : vector<8x384xf32>
    %201 = tpu.matmul %197, %10, %cst_48 {dimension_numbers = #tpu.dot_dimension_numbers<[1], [0], [0], [1], [0, 0, 1, 1], [], []>} : vector<8x128xf32>, vector<128x384xf32>, vector<8x384xf32> -> vector<8x384xf32>
    %202 = vector.broadcast %11 : vector<1x384xf32> to vector<8x384xf32>
    %203 = arith.addf %201, %202 : vector<8x384xf32>
    %204 = vector.extract_strided_slice %200 {offsets = [0, 0], sizes = [8, 128], strides = [1, 1]} : vector<8x384xf32> to vector<8x128xf32>
    %205 = vector.extract_strided_slice %203 {offsets = [0, 0], sizes = [8, 128], strides = [1, 1]} : vector<8x384xf32> to vector<8x128xf32>
    %206 = arith.addf %204, %205 : vector<8x128xf32>
    %207 = arith.negf %206 : vector<8x128xf32>
    %208 = math.exp %207 : vector<8x128xf32>
    %cst_49 = arith.constant 1.000000e+00 : f32
    %209 = vector.broadcast %cst_49 : f32 to vector<8x128xf32>
    %210 = arith.addf %209, %208 : vector<8x128xf32>
    %211 = arith.divf %209, %210 : vector<8x128xf32>
    %212 = vector.extract_strided_slice %200 {offsets = [0, 128], sizes = [8, 128], strides = [1, 1]} : vector<8x384xf32> to vector<8x128xf32>
    %213 = vector.extract_strided_slice %203 {offsets = [0, 128], sizes = [8, 128], strides = [1, 1]} : vector<8x384xf32> to vector<8x128xf32>
    %214 = arith.addf %212, %213 : vector<8x128xf32>
    %215 = arith.negf %214 : vector<8x128xf32>
    %216 = math.exp %215 : vector<8x128xf32>
    %cst_50 = arith.constant 1.000000e+00 : f32
    %217 = vector.broadcast %cst_50 : f32 to vector<8x128xf32>
    %218 = arith.addf %217, %216 : vector<8x128xf32>
    %219 = arith.divf %217, %218 : vector<8x128xf32>
    %220 = vector.extract_strided_slice %200 {offsets = [0, 256], sizes = [8, 128], strides = [1, 1]} : vector<8x384xf32> to vector<8x128xf32>
    %221 = vector.extract_strided_slice %203 {offsets = [0, 256], sizes = [8, 128], strides = [1, 1]} : vector<8x384xf32> to vector<8x128xf32>
    %222 = arith.mulf %211, %221 : vector<8x128xf32>
    %223 = arith.addf %220, %222 : vector<8x128xf32>
    %224 = math.tanh %223 : vector<8x128xf32>
    %cst_51 = arith.constant 1.000000e+00 : f32
    %225 = vector.broadcast %cst_51 : f32 to vector<8x128xf32>
    %226 = arith.subf %225, %219 : vector<8x128xf32>
    %227 = arith.mulf %226, %224 : vector<8x128xf32>
    %228 = arith.mulf %219, %197 : vector<8x128xf32>
    %229 = arith.addf %227, %228 : vector<8x128xf32>
    %230 = vector.broadcast %c5_i32 : i32 to vector<8x1xi32>
    %231 = arith.cmpi slt, %230, %9 : vector<8x1xi32>
    %232 = vector.shape_cast %231 : vector<8x1xi1> to vector<8x1xi1>
    %233 = vector.broadcast %232 : vector<8x1xi1> to vector<8x128xi1>
    %234 = arith.select %233, %229, %197 : vector<8x128xi1>, vector<8x128xf32>
    %c6_i32 = arith.constant 6 : i32
    %235 = arith.index_cast %c6_i32 : i32 to index
    %c0_52 = arith.constant 0 : index
    %c0_53 = arith.constant 0 : index
    %236 = vector.load %arg12[%235, %c0_52, %c0_53] : memref<8x8x384xf32, #tpu.memory_space<vmem>>, vector<1x8x384xf32>
    %237 = vector.shape_cast %236 : vector<1x8x384xf32> to vector<8x384xf32>
    %cst_54 = arith.constant dense<0.000000e+00> : vector<8x384xf32>
    %238 = tpu.matmul %234, %10, %cst_54 {dimension_numbers = #tpu.dot_dimension_numbers<[1], [0], [0], [1], [0, 0, 1, 1], [], []>} : vector<8x128xf32>, vector<128x384xf32>, vector<8x384xf32> -> vector<8x384xf32>
    %239 = vector.broadcast %11 : vector<1x384xf32> to vector<8x384xf32>
    %240 = arith.addf %238, %239 : vector<8x384xf32>
    %241 = vector.extract_strided_slice %237 {offsets = [0, 0], sizes = [8, 128], strides = [1, 1]} : vector<8x384xf32> to vector<8x128xf32>
    %242 = vector.extract_strided_slice %240 {offsets = [0, 0], sizes = [8, 128], strides = [1, 1]} : vector<8x384xf32> to vector<8x128xf32>
    %243 = arith.addf %241, %242 : vector<8x128xf32>
    %244 = arith.negf %243 : vector<8x128xf32>
    %245 = math.exp %244 : vector<8x128xf32>
    %cst_55 = arith.constant 1.000000e+00 : f32
    %246 = vector.broadcast %cst_55 : f32 to vector<8x128xf32>
    %247 = arith.addf %246, %245 : vector<8x128xf32>
    %248 = arith.divf %246, %247 : vector<8x128xf32>
    %249 = vector.extract_strided_slice %237 {offsets = [0, 128], sizes = [8, 128], strides = [1, 1]} : vector<8x384xf32> to vector<8x128xf32>
    %250 = vector.extract_strided_slice %240 {offsets = [0, 128], sizes = [8, 128], strides = [1, 1]} : vector<8x384xf32> to vector<8x128xf32>
    %251 = arith.addf %249, %250 : vector<8x128xf32>
    %252 = arith.negf %251 : vector<8x128xf32>
    %253 = math.exp %252 : vector<8x128xf32>
    %cst_56 = arith.constant 1.000000e+00 : f32
    %254 = vector.broadcast %cst_56 : f32 to vector<8x128xf32>
    %255 = arith.addf %254, %253 : vector<8x128xf32>
    %256 = arith.divf %254, %255 : vector<8x128xf32>
    %257 = vector.extract_strided_slice %237 {offsets = [0, 256], sizes = [8, 128], strides = [1, 1]} : vector<8x384xf32> to vector<8x128xf32>
    %258 = vector.extract_strided_slice %240 {offsets = [0, 256], sizes = [8, 128], strides = [1, 1]} : vector<8x384xf32> to vector<8x128xf32>
    %259 = arith.mulf %248, %258 : vector<8x128xf32>
    %260 = arith.addf %257, %259 : vector<8x128xf32>
    %261 = math.tanh %260 : vector<8x128xf32>
    %cst_57 = arith.constant 1.000000e+00 : f32
    %262 = vector.broadcast %cst_57 : f32 to vector<8x128xf32>
    %263 = arith.subf %262, %256 : vector<8x128xf32>
    %264 = arith.mulf %263, %261 : vector<8x128xf32>
    %265 = arith.mulf %256, %234 : vector<8x128xf32>
    %266 = arith.addf %264, %265 : vector<8x128xf32>
    %267 = vector.broadcast %c6_i32 : i32 to vector<8x1xi32>
    %268 = arith.cmpi slt, %267, %9 : vector<8x1xi32>
    %269 = vector.shape_cast %268 : vector<8x1xi1> to vector<8x1xi1>
    %270 = vector.broadcast %269 : vector<8x1xi1> to vector<8x128xi1>
    %271 = arith.select %270, %266, %234 : vector<8x128xi1>, vector<8x128xf32>
    %c7_i32 = arith.constant 7 : i32
    %272 = arith.index_cast %c7_i32 : i32 to index
    %c0_58 = arith.constant 0 : index
    %c0_59 = arith.constant 0 : index
    %273 = vector.load %arg12[%272, %c0_58, %c0_59] : memref<8x8x384xf32, #tpu.memory_space<vmem>>, vector<1x8x384xf32>
    %274 = vector.shape_cast %273 : vector<1x8x384xf32> to vector<8x384xf32>
    %cst_60 = arith.constant dense<0.000000e+00> : vector<8x384xf32>
    %275 = tpu.matmul %271, %10, %cst_60 {dimension_numbers = #tpu.dot_dimension_numbers<[1], [0], [0], [1], [0, 0, 1, 1], [], []>} : vector<8x128xf32>, vector<128x384xf32>, vector<8x384xf32> -> vector<8x384xf32>
    %276 = vector.broadcast %11 : vector<1x384xf32> to vector<8x384xf32>
    %277 = arith.addf %275, %276 : vector<8x384xf32>
    %278 = vector.extract_strided_slice %274 {offsets = [0, 0], sizes = [8, 128], strides = [1, 1]} : vector<8x384xf32> to vector<8x128xf32>
    %279 = vector.extract_strided_slice %277 {offsets = [0, 0], sizes = [8, 128], strides = [1, 1]} : vector<8x384xf32> to vector<8x128xf32>
    %280 = arith.addf %278, %279 : vector<8x128xf32>
    %281 = arith.negf %280 : vector<8x128xf32>
    %282 = math.exp %281 : vector<8x128xf32>
    %cst_61 = arith.constant 1.000000e+00 : f32
    %283 = vector.broadcast %cst_61 : f32 to vector<8x128xf32>
    %284 = arith.addf %283, %282 : vector<8x128xf32>
    %285 = arith.divf %283, %284 : vector<8x128xf32>
    %286 = vector.extract_strided_slice %274 {offsets = [0, 128], sizes = [8, 128], strides = [1, 1]} : vector<8x384xf32> to vector<8x128xf32>
    %287 = vector.extract_strided_slice %277 {offsets = [0, 128], sizes = [8, 128], strides = [1, 1]} : vector<8x384xf32> to vector<8x128xf32>
    %288 = arith.addf %286, %287 : vector<8x128xf32>
    %289 = arith.negf %288 : vector<8x128xf32>
    %290 = math.exp %289 : vector<8x128xf32>
    %cst_62 = arith.constant 1.000000e+00 : f32
    %291 = vector.broadcast %cst_62 : f32 to vector<8x128xf32>
    %292 = arith.addf %291, %290 : vector<8x128xf32>
    %293 = arith.divf %291, %292 : vector<8x128xf32>
    %294 = vector.extract_strided_slice %274 {offsets = [0, 256], sizes = [8, 128], strides = [1, 1]} : vector<8x384xf32> to vector<8x128xf32>
    %295 = vector.extract_strided_slice %277 {offsets = [0, 256], sizes = [8, 128], strides = [1, 1]} : vector<8x384xf32> to vector<8x128xf32>
    %296 = arith.mulf %285, %295 : vector<8x128xf32>
    %297 = arith.addf %294, %296 : vector<8x128xf32>
    %298 = math.tanh %297 : vector<8x128xf32>
    %cst_63 = arith.constant 1.000000e+00 : f32
    %299 = vector.broadcast %cst_63 : f32 to vector<8x128xf32>
    %300 = arith.subf %299, %293 : vector<8x128xf32>
    %301 = arith.mulf %300, %298 : vector<8x128xf32>
    %302 = arith.mulf %293, %271 : vector<8x128xf32>
    %303 = arith.addf %301, %302 : vector<8x128xf32>
    %304 = vector.broadcast %c7_i32 : i32 to vector<8x1xi32>
    %305 = arith.cmpi slt, %304, %9 : vector<8x1xi32>
    %306 = vector.shape_cast %305 : vector<8x1xi1> to vector<8x1xi1>
    %307 = vector.broadcast %306 : vector<8x1xi1> to vector<8x128xi1>
    %308 = arith.select %307, %303, %271 : vector<8x128xi1>, vector<8x128xf32>
    %c8_i32 = arith.constant 8 : i32
    %c0_64 = arith.constant 0 : index
    %c0_65 = arith.constant 0 : index
    %309 = vector.load %arg8[%c0_64, %c0_65] : memref<128x256xf32, #tpu.memory_space<vmem>>, vector<128x256xf32>
    %cst_66 = arith.constant dense<0.000000e+00> : vector<8x256xf32>
    %310 = tpu.matmul %308, %309, %cst_66 {dimension_numbers = #tpu.dot_dimension_numbers<[1], [0], [0], [1], [0, 0, 1, 1], [], []>} : vector<8x128xf32>, vector<128x256xf32>, vector<8x256xf32> -> vector<8x256xf32>
    %c0_67 = arith.constant 0 : index
    %c0_68 = arith.constant 0 : index
    %311 = vector.load %arg9[%c0_67, %c0_68] : memref<1x256xf32, #tpu.memory_space<vmem>>, vector<1x256xf32>
    %312 = vector.broadcast %311 : vector<1x256xf32> to vector<8x256xf32>
    %313 = arith.addf %310, %312 : vector<8x256xf32>
    %314 = vector.extract_strided_slice %313 {offsets = [0, 0], sizes = [8, 128], strides = [1, 1]} : vector<8x256xf32> to vector<8x128xf32>
    %315 = vector.extract_strided_slice %313 {offsets = [0, 128], sizes = [8, 128], strides = [1, 1]} : vector<8x256xf32> to vector<8x128xf32>
    %c0_69 = arith.constant 0 : index
    %c0_70 = arith.constant 0 : index
    %316 = vector.load %arg3[%c0_69, %c0_70] : memref<8x128xf32, #tpu.memory_space<vmem>>, vector<8x128xf32>
    %317 = tpu.iota {dimensions = array<i32: 1>} : vector<8x128xi32>
    %c4_i32_71 = arith.constant 4 : i32
    %318 = vector.broadcast %c4_i32_71 : i32 to vector<8x128xi32>
    %319 = arith.cmpi slt, %317, %318 : vector<8x128xi32>
    %c8_i32_72 = arith.constant 8 : i32
    %320 = vector.broadcast %c8_i32_72 : i32 to vector<8x128xi32>
    %321 = arith.cmpi slt, %317, %320 : vector<8x128xi32>
    %cst_73 = arith.constant dense<true> : vector<8x128xi1>
    %322 = arith.xori %319, %cst_73 : vector<8x128xi1>
    %cst_74 = arith.constant 0.000000e+00 : f32
    %323 = vector.broadcast %cst_74 : f32 to vector<8x128xf32>
    %324 = arith.cmpf oeq, %316, %323 : vector<8x128xf32>
    %325 = arith.ori %322, %324 : vector<8x128xi1>
    %cst_75 = arith.constant -1.000000e+05 : f32
    %326 = vector.broadcast %cst_75 : f32 to vector<8x128xf32>
    %327 = arith.select %325, %326, %314 : vector<8x128xi1>, vector<8x128xf32>
    %cst_76 = arith.constant -1.000000e+05 : f32
    %328 = vector.broadcast %cst_76 : f32 to vector<8x128xf32>
    %329 = arith.cmpf one, %327, %328 : vector<8x128xf32>
    %330 = arith.andi %319, %329 : vector<8x128xi1>
    %cst_77 = arith.constant 1.000000e+00 : f32
    %cst_78 = arith.constant 0.000000e+00 : f32
    %331 = vector.broadcast %cst_77 : f32 to vector<8x128xf32>
    %332 = vector.broadcast %cst_78 : f32 to vector<8x128xf32>
    %333 = arith.select %330, %331, %332 : vector<8x128xi1>, vector<8x128xf32>
    %cst_79 = arith.constant dense<0xFF800000> : vector<8xf32>
    %334 = vector.multi_reduction <maximumf>, %333, %cst_79 [1] : vector<8x128xf32> to vector<8xf32>
    %cst_80 = arith.constant 0.000000e+00 : f32
    %335 = vector.broadcast %cst_80 : f32 to vector<8xf32>
    %336 = arith.cmpf ogt, %334, %335 : vector<8xf32>
    %337 = vector.shape_cast %336 : vector<8xi1> to vector<8x1xi1>
    %cst_81 = arith.constant dense<true> : vector<8x1xi1>
    %338 = arith.xori %337, %cst_81 : vector<8x1xi1>
    %339 = vector.broadcast %338 : vector<8x1xi1> to vector<8x128xi1>
    %340 = arith.andi %339, %319 : vector<8x128xi1>
    %cst_82 = arith.constant 0.000000e+00 : f32
    %341 = vector.broadcast %cst_82 : f32 to vector<8x128xf32>
    %342 = arith.select %340, %341, %327 : vector<8x128xi1>, vector<8x128xf32>
    %343 = vector.extract_strided_slice %316 {offsets = [0, 4], sizes = [8, 1], strides = [1, 1]} : vector<8x128xf32> to vector<8x1xf32>
    %344 = vector.extract_strided_slice %316 {offsets = [0, 5], sizes = [8, 1], strides = [1, 1]} : vector<8x128xf32> to vector<8x1xf32>
    %345 = arith.addf %343, %344 : vector<8x1xf32>
    %cst_83 = arith.constant 5.000000e-01 : f32
    %346 = vector.broadcast %cst_83 : f32 to vector<8x1xf32>
    %347 = arith.mulf %345, %346 : vector<8x1xf32>
    %348 = vector.extract_strided_slice %316 {offsets = [0, 6], sizes = [8, 1], strides = [1, 1]} : vector<8x128xf32> to vector<8x1xf32>
    %c0_84 = arith.constant 0 : index
    %c0_85 = arith.constant 0 : index
    %349 = vector.load %arg10[%c0_84, %c0_85] : memref<1x128xf32, #tpu.memory_space<vmem>>, vector<1x128xf32>
    %350 = vector.broadcast %349 : vector<1x128xf32> to vector<8x128xf32>
    %351 = vector.broadcast %348 : vector<8x1xf32> to vector<8x128xf32>
    %352 = arith.mulf %350, %351 : vector<8x128xf32>
    %c0_i32_86 = arith.constant 0 : i32
    %353 = vector.broadcast %c0_i32_86 : i32 to vector<8x128xi32>
    %354 = arith.cmpi eq, %317, %353 : vector<8x128xi32>
    %c1_i32_87 = arith.constant 1 : i32
    %355 = vector.broadcast %c1_i32_87 : i32 to vector<8x128xi32>
    %356 = arith.cmpi eq, %317, %355 : vector<8x128xi32>
    %c2_i32_88 = arith.constant 2 : i32
    %357 = vector.broadcast %c2_i32_88 : i32 to vector<8x128xi32>
    %358 = arith.cmpi eq, %317, %357 : vector<8x128xi32>
    %359 = vector.shape_cast %344 : vector<8x1xf32> to vector<8x1xf32>
    %360 = vector.broadcast %359 : vector<8x1xf32> to vector<8x128xf32>
    %361 = arith.select %358, %360, %352 : vector<8x128xi1>, vector<8x128xf32>
    %362 = vector.shape_cast %347 : vector<8x1xf32> to vector<8x1xf32>
    %363 = vector.broadcast %362 : vector<8x1xf32> to vector<8x128xf32>
    %364 = arith.select %356, %363, %361 : vector<8x128xi1>, vector<8x128xf32>
    %365 = vector.shape_cast %343 : vector<8x1xf32> to vector<8x1xf32>
    %366 = vector.broadcast %365 : vector<8x1xf32> to vector<8x128xf32>
    %367 = arith.select %354, %366, %364 : vector<8x128xi1>, vector<8x128xf32>
    %cst_89 = arith.constant dense<true> : vector<8x128xi1>
    %368 = arith.xori %321, %cst_89 : vector<8x128xi1>
    %369 = vector.broadcast %343 : vector<8x1xf32> to vector<8x128xf32>
    %370 = arith.cmpf ogt, %369, %367 : vector<8x128xf32>
    %371 = arith.ori %368, %370 : vector<8x128xi1>
    %372 = vector.broadcast %344 : vector<8x1xf32> to vector<8x128xf32>
    %373 = arith.cmpf olt, %372, %367 : vector<8x128xf32>
    %374 = arith.ori %371, %373 : vector<8x128xi1>
    %cst_90 = arith.constant -1.000000e+05 : f32
    %375 = vector.broadcast %cst_90 : f32 to vector<8x128xf32>
    %376 = arith.select %374, %375, %315 : vector<8x128xi1>, vector<8x128xf32>
    %cst_91 = arith.constant -1.000000e+05 : f32
    %377 = vector.broadcast %cst_91 : f32 to vector<8x128xf32>
    %378 = arith.cmpf one, %376, %377 : vector<8x128xf32>
    %379 = arith.andi %321, %378 : vector<8x128xi1>
    %cst_92 = arith.constant 1.000000e+00 : f32
    %cst_93 = arith.constant 0.000000e+00 : f32
    %380 = vector.broadcast %cst_92 : f32 to vector<8x128xf32>
    %381 = vector.broadcast %cst_93 : f32 to vector<8x128xf32>
    %382 = arith.select %379, %380, %381 : vector<8x128xi1>, vector<8x128xf32>
    %cst_94 = arith.constant dense<0xFF800000> : vector<8xf32>
    %383 = vector.multi_reduction <maximumf>, %382, %cst_94 [1] : vector<8x128xf32> to vector<8xf32>
    %cst_95 = arith.constant 0.000000e+00 : f32
    %384 = vector.broadcast %cst_95 : f32 to vector<8xf32>
    %385 = arith.cmpf ogt, %383, %384 : vector<8xf32>
    %386 = vector.shape_cast %385 : vector<8xi1> to vector<8x1xi1>
    %cst_96 = arith.constant dense<true> : vector<8x1xi1>
    %387 = arith.xori %386, %cst_96 : vector<8x1xi1>
    %388 = vector.broadcast %387 : vector<8x1xi1> to vector<8x128xi1>
    %389 = arith.andi %388, %321 : vector<8x128xi1>
    %cst_97 = arith.constant 0.000000e+00 : f32
    %390 = vector.broadcast %cst_97 : f32 to vector<8x128xf32>
    %391 = arith.select %389, %390, %376 : vector<8x128xi1>, vector<8x128xf32>
    %392 = vector.extract_strided_slice %316 {offsets = [0, 2], sizes = [8, 1], strides = [1, 1]} : vector<8x128xf32> to vector<8x1xf32>
    %cst_98 = arith.constant 0.000000e+00 : f32
    %393 = vector.broadcast %cst_98 : f32 to vector<8x1xf32>
    %394 = arith.cmpf oeq, %392, %393 : vector<8x1xf32>
    %cst_99 = arith.constant -1.000000e+05 : f32
    %395 = vector.shape_cast %394 : vector<8x1xi1> to vector<8x1xi1>
    %396 = vector.broadcast %395 : vector<8x1xi1> to vector<8x128xi1>
    %397 = vector.broadcast %cst_99 : f32 to vector<8x128xf32>
    %398 = arith.select %396, %397, %391 : vector<8x128xi1>, vector<8x128xf32>
    %cst_100 = arith.constant -1.000000e+05 : f32
    %399 = vector.broadcast %cst_100 : f32 to vector<8x128xf32>
    %400 = arith.select %319, %342, %399 : vector<8x128xi1>, vector<8x128xf32>
    %cst_101 = arith.constant dense<0xFF800000> : vector<8xf32>
    %401 = vector.multi_reduction <maximumf>, %400, %cst_101 [1] : vector<8x128xf32> to vector<8xf32>
    %402 = vector.shape_cast %401 : vector<8xf32> to vector<8x1xf32>
    %403 = vector.broadcast %402 : vector<8x1xf32> to vector<8x128xf32>
    %404 = arith.subf %342, %403 : vector<8x128xf32>
    %cst_102 = arith.constant -1.000000e+05 : f32
    %405 = vector.broadcast %cst_102 : f32 to vector<8x128xf32>
    %406 = arith.select %319, %404, %405 : vector<8x128xi1>, vector<8x128xf32>
    %407 = math.exp %406 : vector<8x128xf32>
    %408 = vector.broadcast %402 : vector<8x1xf32> to vector<8x128xf32>
    %409 = arith.subf %342, %408 : vector<8x128xf32>
    %cst_103 = arith.constant dense<0.000000e+00> : vector<8xf32>
    %410 = vector.multi_reduction <add>, %407, %cst_103 [1] : vector<8x128xf32> to vector<8xf32>
    %411 = vector.shape_cast %410 : vector<8xf32> to vector<8x1xf32>
    %412 = math.log %411 : vector<8x1xf32>
    %413 = vector.broadcast %412 : vector<8x1xf32> to vector<8x128xf32>
    %414 = arith.subf %409, %413 : vector<8x128xf32>
    %c0_104 = arith.constant 0 : index
    %c0_105 = arith.constant 0 : index
    %415 = vector.load %arg11[%c0_104, %c0_105] : memref<8x256xf32, #tpu.memory_space<vmem>>, vector<8x128xf32>
    tpu.vector_store %arg11[%c0_104, %c0_105], %414 {strides = array<i32>} : memref<8x256xf32, #tpu.memory_space<vmem>>, vector<8x128xf32>,
    %cst_106 = arith.constant -1.000000e+05 : f32
    %416 = vector.broadcast %cst_106 : f32 to vector<8x128xf32>
    %417 = arith.select %321, %398, %416 : vector<8x128xi1>, vector<8x128xf32>
    %cst_107 = arith.constant dense<0xFF800000> : vector<8xf32>
    %418 = vector.multi_reduction <maximumf>, %417, %cst_107 [1] : vector<8x128xf32> to vector<8xf32>
    %419 = vector.shape_cast %418 : vector<8xf32> to vector<8x1xf32>
    %420 = vector.broadcast %419 : vector<8x1xf32> to vector<8x128xf32>
    %421 = arith.subf %398, %420 : vector<8x128xf32>
    %cst_108 = arith.constant -1.000000e+05 : f32
    %422 = vector.broadcast %cst_108 : f32 to vector<8x128xf32>
    %423 = arith.select %321, %421, %422 : vector<8x128xi1>, vector<8x128xf32>
    %424 = math.exp %423 : vector<8x128xf32>
    %425 = vector.broadcast %419 : vector<8x1xf32> to vector<8x128xf32>
    %426 = arith.subf %398, %425 : vector<8x128xf32>
    %cst_109 = arith.constant dense<0.000000e+00> : vector<8xf32>
    %427 = vector.multi_reduction <add>, %424, %cst_109 [1] : vector<8x128xf32> to vector<8xf32>
    %428 = vector.shape_cast %427 : vector<8xf32> to vector<8x1xf32>
    %429 = math.log %428 : vector<8x1xf32>
    %430 = vector.broadcast %429 : vector<8x1xf32> to vector<8x128xf32>
    %431 = arith.subf %426, %430 : vector<8x128xf32>
    %c0_110 = arith.constant 0 : index
    %c128 = arith.constant 128 : index
    %432 = vector.load %arg11[%c0_110, %c128] : memref<8x256xf32, #tpu.memory_space<vmem>>, vector<8x128xf32>
    tpu.vector_store %arg11[%c0_110, %c128], %431 {strides = array<i32>} : memref<8x256xf32, #tpu.memory_space<vmem>>, vector<8x128xf32>,
    return
  }
  func.func @transform_0(%arg0: i32) -> (i32, i32, i32) {
    %c0_i32 = arith.constant 0 : i32
    %c0_i32_0 = arith.constant 0 : i32
    %c0_i32_1 = arith.constant 0 : i32
    return %c0_i32, %arg0, %c0_i32_0 : i32, i32, i32
  }
  func.func @transform_1(%arg0: i32) -> (i32, i32) {
    %c0_i32 = arith.constant 0 : i32
    %c0_i32_0 = arith.constant 0 : i32
    return %arg0, %c0_i32 : i32, i32
  }
  func.func @transform_2(%arg0: i32) -> (i32, i32) {
    %c0_i32 = arith.constant 0 : i32
    %c0_i32_0 = arith.constant 0 : i32
    return %arg0, %c0_i32 : i32, i32
  }
  func.func @transform_3(%arg0: i32) -> (i32, i32) {
    %c0_i32 = arith.constant 0 : i32
    %c0_i32_0 = arith.constant 0 : i32
    %c0_i32_1 = arith.constant 0 : i32
    return %c0_i32, %c0_i32_0 : i32, i32
  }
  func.func @transform_4(%arg0: i32) -> (i32, i32) {
    %c0_i32 = arith.constant 0 : i32
    %c0_i32_0 = arith.constant 0 : i32
    %c0_i32_1 = arith.constant 0 : i32
    return %c0_i32, %c0_i32_0 : i32, i32
  }
  func.func @transform_5(%arg0: i32) -> (i32, i32) {
    %c0_i32 = arith.constant 0 : i32
    %c0_i32_0 = arith.constant 0 : i32
    %c0_i32_1 = arith.constant 0 : i32
    return %c0_i32, %c0_i32_0 : i32, i32
  }
  func.func @transform_6(%arg0: i32) -> (i32, i32) {
    %c0_i32 = arith.constant 0 : i32
    %c0_i32_0 = arith.constant 0 : i32
    %c0_i32_1 = arith.constant 0 : i32
    return %c0_i32, %c0_i32_0 : i32, i32
  }
  func.func @transform_7(%arg0: i32) -> (i32, i32) {
    %c0_i32 = arith.constant 0 : i32
    %c0_i32_0 = arith.constant 0 : i32
    %c0_i32_1 = arith.constant 0 : i32
    return %c0_i32, %c0_i32_0 : i32, i32
  }
  func.func @transform_8(%arg0: i32) -> (i32, i32) {
    %c0_i32 = arith.constant 0 : i32
    %c0_i32_0 = arith.constant 0 : i32
    %c0_i32_1 = arith.constant 0 : i32
    return %c0_i32, %c0_i32_0 : i32, i32
  }
  func.func @transform_9(%arg0: i32) -> (i32, i32) {
    %c0_i32 = arith.constant 0 : i32
    %c0_i32_0 = arith.constant 0 : i32
    %c0_i32_1 = arith.constant 0 : i32
    return %c0_i32, %c0_i32_0 : i32, i32
  }
  func.func @transform_10(%arg0: i32) -> (i32, i32) {
    %c0_i32 = arith.constant 0 : i32
    %c0_i32_0 = arith.constant 0 : i32
    return %arg0, %c0_i32 : i32, i32
  }
}

</mosaic_0001>

<llo_original>
// kernel: policy_forward.1
$region0: #{policy_forward.1}
  #allocation0 [shape = 'u32[]', space=smem, size = 0x4, offset = 0x4, fixed_abs, tag = 'smem constant byte address 0x4 - core index']
  #allocation1 [shape = 'u32[144,128]{1,0:T(1,128)}', space=vmem, size = 0x12000, scoped, tag = 'internal scratch']
  #allocation2 [shape = 'f32[8,8,384]{2,1,0:T(8,128)}', space=vmem, size = 0x18000, scoped, tag = 'scratch operand']
  %s0 = inlined_call_operand.vmem [shape: f32[8,8,24], index: 0, kind: input, shape index: {}]
  %s1 = inlined_call_operand.vmem [shape: s32[8,1], index: 1, kind: input, shape index: {}]
  %s2 = inlined_call_operand.vmem [shape: f32[8,128], index: 2, kind: input, shape index: {}]
  %s3 = inlined_call_operand.vmem [shape: f32[24,384], index: 3, kind: input, shape index: {}]
  %s4 = inlined_call_operand.vmem [shape: f32[128,384], index: 4, kind: input, shape index: {}]
  %s5 = inlined_call_operand.vmem [shape: f32[1,384], index: 5, kind: input, shape index: {}]
  %s6 = inlined_call_operand.vmem [shape: f32[1,384], index: 6, kind: input, shape index: {}]
  %s7 = inlined_call_operand.vmem [shape: f32[128,256], index: 7, kind: input, shape index: {}]
  %s8 = inlined_call_operand.vmem [shape: f32[1,256], index: 8, kind: input, shape index: {}]
  %s9 = inlined_call_operand.vmem [shape: f32[1,128], index: 9, kind: input, shape index: {}]
  %s10 = inlined_call_operand.vmem [shape: f32[8,256], index: 10, kind: output, shape index: {}]
  %s11 = sld [smem:[#allocation0]]
  $region50: #{policy_forward.1} parent=0
    _
  %s13 = ssub.s32 1, %s11
  %s14 = scalar_select 0, %s13, %s11
  // Predicated region
  $region2: #{policy_forward.1} parent=0 // pred_check
    _
  $region3: #{policy_forward.1} parent=0 // pred_check_branch
    %16 = sbr.rel (0) target = $region5
  $region4: #{policy_forward.1} parent=0 // pred_region
    _
  $region5: #{policy_forward.1} parent=0 // pred_fallthru
    _
  // Predicated region
  $region6: #{policy_forward.1} parent=0 // pred_check
    _
  $region7: #{policy_forward.1} parent=0 // pred_check_branch
    %18 = sbr.rel (0) target = $region9
  $region8: #{policy_forward.1} parent=0 // pred_region
    _
  $region9: #{policy_forward.1} parent=0 // pred_fallthru
    _
  // Predicated region
  $region10: #{policy_forward.1} parent=0 // pred_check
    _
  $region11: #{policy_forward.1} parent=0 // pred_check_branch
    %20 = sbr.rel (0) target = $region13
  $region12: #{policy_forward.1} parent=0 // pred_region
    _
  $region13: #{policy_forward.1} parent=0 // pred_fallthru
    _
  // Predicated region
  $region14: #{policy_forward.1} parent=0 // pred_check
    _
  $region15: #{policy_forward.1} parent=0 // pred_check_branch
    %22 = sbr.rel (0) target = $region17
  $region16: #{policy_forward.1} parent=0 // pred_region
    _
  $region17: #{policy_forward.1} parent=0 // pred_fallthru
    _
  // Predicated region
  $region18: #{policy_forward.1} parent=0 // pred_check
    _
  $region19: #{policy_forward.1} parent=0 // pred_check_branch
    %24 = sbr.rel (0) target = $region21
  $region20: #{policy_forward.1} parent=0 // pred_region
    _
  $region21: #{policy_forward.1} parent=0 // pred_fallthru
    _
  // Predicated region
  $region22: #{policy_forward.1} parent=0 // pred_check
    _
  $region23: #{policy_forward.1} parent=0 // pred_check_branch
    %26 = sbr.rel (0) target = $region25
  $region24: #{policy_forward.1} parent=0 // pred_region
    _
  $region25: #{policy_forward.1} parent=0 // pred_fallthru
    _
  // Predicated region
  $region26: #{policy_forward.1} parent=0 // pred_check
    _
  $region27: #{policy_forward.1} parent=0 // pred_check_branch
    %28 = sbr.rel (0) target = $region29
  $region28: #{policy_forward.1} parent=0 // pred_region
    _
  $region29: #{policy_forward.1} parent=0 // pred_fallthru
    _
  // Predicated region
  $region30: #{policy_forward.1} parent=0 // pred_check
    _
  $region31: #{policy_forward.1} parent=0 // pred_check_branch
    %30 = sbr.rel (0) target = $region33
  $region32: #{policy_forward.1} parent=0 // pred_region
    _
  $region33: #{policy_forward.1} parent=0 // pred_fallthru
    _
  // Predicated region
  $region34: #{policy_forward.1} parent=0 // pred_check
    _
  $region35: #{policy_forward.1} parent=0 // pred_check_branch
    %32 = sbr.rel (0) target = $region37
  $region36: #{policy_forward.1} parent=0 // pred_region
    _
  $region37: #{policy_forward.1} parent=0 // pred_fallthru
    _
  // Predicated region
  $region38: #{policy_forward.1} parent=0 // pred_check
    _
  $region39: #{policy_forward.1} parent=0 // pred_check_branch
    %34 = sbr.rel (0) target = $region41
  $region40: #{policy_forward.1} parent=0 // pred_region
    _
  $region41: #{policy_forward.1} parent=0 // pred_fallthru
    _
  %v35 = vld [vmem:[%s0] sm:$0xff]
  %v36 = vld [vmem:[%s0 + $0x8] sm:$0xff]
  %v37 = vld [vmem:[%s0 + $0x10] sm:$0xff]
  %v38 = vld [vmem:[%s0 + $0x18] sm:$0xff]
  %v39 = vld [vmem:[%s0 + $0x20] sm:$0xff]
  %v40 = vld [vmem:[%s0 + $0x28] sm:$0xff]
  %v41 = vld [vmem:[%s0 + $0x30] sm:$0xff]
  %v42 = vld [vmem:[%s0 + $0x38] sm:$0xff]
  %v43 = vld [vmem:[%s3] sm:$0xff]
  %v44 = vld [vmem:[%s3 + $0x8] sm:$0xff]
  %v45 = vld [vmem:[%s3 + $0x10] sm:$0xff]
  %v46 = vld [vmem:[%s3 + $0x18] sm:$0xff]
  %v47 = vld [vmem:[%s3 + $0x20] sm:$0xff]
  %v48 = vld [vmem:[%s3 + $0x28] sm:$0xff]
  %v49 = vld [vmem:[%s3 + $0x30] sm:$0xff]
  %v50 = vld [vmem:[%s3 + $0x38] sm:$0xff]
  %v51 = vld [vmem:[%s3 + $0x40] sm:$0xff]
  %v52 = vld [vmem:[%s5] sm:$0x7]
  %v54 = vlaneseq
  %v55 = vshrl.u32 %v54, 7
  %v56 = vsub.s32 0, %v55
  %v57 = vrot.slane %v52, %v56
  %v58 = vlaneseq
  %v59 = vshrl.u32 %v58, 7
  %v60 = vsub.s32 1, %v59
  %v61 = vrot.slane %v52, %v60
  %v62 = vlaneseq
  %v63 = vshrl.u32 %v62, 7
  %v64 = vsub.s32 2, %v63
  %v65 = vrot.slane %v52, %v64
  %vm69 = vcmask 195584
  %v71 = vsel %vm69, %v35, 0
  %v74 = vsel %vm69, %v36, 0
  %v77 = vsel %vm69, %v37, 0
  %v80 = vsel %vm69, %v38, 0
  %v83 = vsel %vm69, %v39, 0
  %v86 = vsel %vm69, %v40, 0
  %v89 = vsel %vm69, %v41, 0
  %v92 = vsel %vm69, %v42, 0
  %94 = vmatprep.subr.mxu0 %v44
  %95 = vmatpush1.msra.mxu0 %v43
  %96 = vmatprep.subr.mxu0 %v47
  %97 = vmatpush1.msra.mxu0 %v46
  %98 = vmatprep.subr.mxu0 %v50
  %99 = vmatpush1.msra.mxu0 %v49
  %100 = vmatprep.subr.mxu0 0.0
  %101 = vmatpush1.msra.mxu0 0.0
  %102 = vmatprep.subr.mxu0 0.0
  %103 = vmatpush1.msra.mxu0 0.0
  %104 = vmatprep.subr.mxu0 0.0
  %105 = vmatpush1.msra.mxu0 0.0
  %106 = vmatprep.subr.mxu0 0.0
  %107 = vmatpush1.msra.mxu0 0.0
  %108 = vmatprep.subr.mxu0 0.0
  %109 = vmatpush1.msra.mxu0 0.0
  %110 = vmatprep.subr.mxu0 0.0
  %111 = vmatpush1.msra.mxu0 0.0
  %112 = vmatprep.subr.mxu0 0.0
  %113 = vmatpush1.msra.mxu0 0.0
  %114 = vmatprep.subr.mxu0 0.0
  %115 = vmatpush1.msra.mxu0 0.0
  %116 = vmatprep.subr.mxu0 0.0
  %117 = vmatpush1.msra.mxu0 0.0
  %118 = vmatprep.subr.mxu0 0.0
  %119 = vmatpush1.msra.mxu0 0.0
  %120 = vmatprep.subr.mxu0 0.0
  %121 = vmatpush1.msra.mxu0 0.0
  %122 = vmatprep.subr.mxu0 0.0
  %123 = vmatpush1.msra.mxu0 0.0
  %124 = vmatprep.subr.mxu0 0.0
  %125 = vmatpush1.msra.mxu0 0.0
  %126 = vmatprep.subr.mxu0 0.0
  %127 = vmatpush1.msra.mxu0 0.0
  %128 = vmatprep.subr.mxu0 0.0
  %129 = vmatpush1.msra.mxu0 0.0
  %130 = vmatprep.subr.mxu0 0.0
  %131 = vmatpush1.msra.mxu0 0.0
  %132 = vmatprep.subr.mxu0 0.0
  %133 = vmatpush1.msra.mxu0 0.0
  %134 = vmatprep.subr.mxu0 0.0
  %135 = vmatpush1.msra.mxu0 0.0
  %136 = vmatprep.subr.mxu0 0.0
  %137 = vmatpush1.msra.mxu0 0.0
  %138 = vmatprep.subr.mxu0 0.0
  %139 = vmatpush1.msra.mxu0 0.0
  %140 = vmatprep.subr.mxu0 0.0
  %141 = vmatpush1.msra.mxu0 0.0
  %142 = vmatprep.subr.mxu0 0.0
  %143 = vmatpush1.msra.mxu0 0.0
  %144 = vmatprep.subr.mxu0 0.0
  %145 = vmatpush1.msra.mxu0 0.0
  %146 = vmatprep.subr.mxu0 0.0
  %147 = vmatpush1.msra.mxu0 0.0
  %148 = vmatprep.subr.mxu0 0.0
  %149 = vmatpush1.msra.mxu0 0.0
  %150 = vmatprep.subr.mxu0 0.0
  %151 = vmatpush1.msra.mxu0 0.0
  %152 = vmatprep.subr.mxu0 0.0
  %153 = vmatpush1.msra.mxu0 0.0
  %154 = vmatprep.subr.mxu0 0.0
  %155 = vmatpush1.msra.mxu0 0.0
  %156 = vmatprep.subr.mxu0 0.0
  %157 = vmatpush1.msra.mxu0 0.0
  %158 = vmatprep.mubr.f32.mxu0 0.0
  %159 = vmatmul.mubr.f32.gmra.mrb[0].mxu0 %v71
  %v160 = vpop.f32.mrb[0].mxu0
  %v161 = vadd.f32 %v57, %v160
  %v162 = vpop.f32.mrb[0].mxu0
  %v163 = vadd.f32 %v61, %v162
  %164 = vmatprep.mubr.f32.mxu0 0.0
  %165 = vmatmul.mubr.f32.gmra.mrb[0].mxu0 %v74
  %v166 = vpop.f32.mrb[0].mxu0
  %v167 = vadd.f32 %v57, %v166
  %v168 = vpop.f32.mrb[0].mxu0
  %v169 = vadd.f32 %v61, %v168
  %170 = vmatprep.mubr.f32.mxu0 0.0
  %171 = vmatmul.mubr.f32.gmra.mrb[0].mxu0 %v77
  %v172 = vpop.f32.mrb[0].mxu0
  %v173 = vadd.f32 %v57, %v172
  %v174 = vpop.f32.mrb[0].mxu0
  %v175 = vadd.f32 %v61, %v174
  %176 = vmatprep.mubr.f32.mxu0 0.0
  %177 = vmatmul.mubr.f32.gmra.mrb[0].mxu0 %v80
  %v178 = vpop.f32.mrb[0].mxu0
  %v179 = vadd.f32 %v57, %v178
  %v180 = vpop.f32.mrb[0].mxu0
  %v181 = vadd.f32 %v61, %v180
  %182 = vmatprep.mubr.f32.mxu0 0.0
  %183 = vmatmul.mubr.f32.gmra.mrb[0].mxu0 %v83
  %v184 = vpop.f32.mrb[0].mxu0
  %v185 = vadd.f32 %v57, %v184
  %v186 = vpop.f32.mrb[0].mxu0
  %v187 = vadd.f32 %v61, %v186
  %188 = vmatprep.mubr.f32.mxu0 0.0
  %189 = vmatmul.mubr.f32.gmra.mrb[0].mxu0 %v86
  %v190 = vpop.f32.mrb[0].mxu0
  %v191 = vadd.f32 %v57, %v190
  %v192 = vpop.f32.mrb[0].mxu0
  %v193 = vadd.f32 %v61, %v192
  %194 = vmatprep.mubr.f32.mxu0 0.0
  %195 = vmatmul.mubr.f32.gmra.mrb[0].mxu0 %v89
  %v196 = vpop.f32.mrb[0].mxu0
  %v197 = vadd.f32 %v57, %v196
  %v198 = vpop.f32.mrb[0].mxu0
  %v199 = vadd.f32 %v61, %v198
  %200 = vmatprep.mubr.f32.mxu0 0.0
  %201 = vmatmul.mubr.f32.gmra.mrb[0].mxu0 %v92
  %v202 = vpop.f32.mrb[0].mxu0
  %v203 = vadd.f32 %v57, %v202
  %v204 = vpop.f32.mrb[0].mxu0
  %v205 = vadd.f32 %v61, %v204
  %206 = vdwg.mxu0
  %207 = vmatprep.subr.mxu0 0.0
  %208 = vmatpush1.msra.mxu0 %v45
  %209 = vmatprep.subr.mxu0 0.0
  %210 = vmatpush1.msra.mxu0 %v48
  %211 = vmatprep.subr.mxu0 0.0
  %212 = vmatpush1.msra.mxu0 %v51
  %213 = vmatprep.subr.mxu0 0.0
  %214 = vmatpush1.msra.mxu0 0.0
  %215 = vmatprep.subr.mxu0 0.0
  %216 = vmatpush1.msra.mxu0 0.0
  %217 = vmatprep.subr.mxu0 0.0
  %218 = vmatpush1.msra.mxu0 0.0
  %219 = vmatprep.subr.mxu0 0.0
  %220 = vmatpush1.msra.mxu0 0.0
  %221 = vmatprep.subr.mxu0 0.0
  %222 = vmatpush1.msra.mxu0 0.0
  %223 = vmatprep.subr.mxu0 0.0
  %224 = vmatpush1.msra.mxu0 0.0
  %225 = vmatprep.subr.mxu0 0.0
  %226 = vmatpush1.msra.mxu0 0.0
  %227 = vmatprep.subr.mxu0 0.0
  %228 = vmatpush1.msra.mxu0 0.0
  %229 = vmatprep.subr.mxu0 0.0
  %230 = vmatpush1.msra.mxu0 0.0
  %231 = vmatprep.subr.mxu0 0.0
  %232 = vmatpush1.msra.mxu0 0.0
  %233 = vmatprep.subr.mxu0 0.0
  %234 = vmatpush1.msra.mxu0 0.0
  %235 = vmatprep.subr.mxu0 0.0
  %236 = vmatpush1.msra.mxu0 0.0
  %237 = vmatprep.subr.mxu0 0.0
  %238 = vmatpush1.msra.mxu0 0.0
  %239 = vmatprep.subr.mxu0 0.0
  %240 = vmatpush1.msra.mxu0 0.0
  %241 = vmatprep.subr.mxu0 0.0
  %242 = vmatpush1.msra.mxu0 0.0
  %243 = vmatprep.subr.mxu0 0.0
  %244 = vmatpush1.msra.mxu0 0.0
  %245 = vmatprep.subr.mxu0 0.0
  %246 = vmatpush1.msra.mxu0 0.0
  %247 = vmatprep.subr.mxu0 0.0
  %248 = vmatpush1.msra.mxu0 0.0
  %249 = vmatprep.subr.mxu0 0.0
  %250 = vmatpush1.msra.mxu0 0.0
  %251 = vmatprep.subr.mxu0 0.0
  %252 = vmatpush1.msra.mxu0 0.0
  %253 = vmatprep.subr.mxu0 0.0
  %254 = vmatpush1.msra.mxu0 0.0
  %255 = vmatprep.subr.mxu0 0.0
  %256 = vmatpush1.msra.mxu0 0.0
  %257 = vmatprep.subr.mxu0 0.0
  %258 = vmatpush1.msra.mxu0 0.0
  %259 = vmatprep.subr.mxu0 0.0
  %260 = vmatpush1.msra.mxu0 0.0
  %261 = vmatprep.subr.mxu0 0.0
  %262 = vmatpush1.msra.mxu0 0.0
  %263 = vmatprep.subr.mxu0 0.0
  %264 = vmatpush1.msra.mxu0 0.0
  %265 = vmatprep.subr.mxu0 0.0
  %266 = vmatpush1.msra.mxu0 0.0
  %267 = vmatprep.subr.mxu0 0.0
  %268 = vmatpush1.msra.mxu0 0.0
  %269 = vmatprep.subr.mxu0 0.0
  %270 = vmatpush1.msra.mxu0 0.0
  %271 = vmatprep.mubr.f32.mxu0 0.0
  %272 = vmatmul.mubr.f32.gmra.mrb[0].mxu0 %v71
  %v273 = vpop.f32.mrb[0].mxu0
  %v274 = vadd.f32 %v65, %v273
  %v275 = vpop.f32.mrb[0].mxu0
  %276 = vmatprep.mubr.f32.mxu0 0.0
  %277 = vmatmul.mubr.f32.gmra.mrb[0].mxu0 %v74
  %v278 = vpop.f32.mrb[0].mxu0
  %v279 = vadd.f32 %v65, %v278
  %v280 = vpop.f32.mrb[0].mxu0
  %281 = vmatprep.mubr.f32.mxu0 0.0
  %282 = vmatmul.mubr.f32.gmra.mrb[0].mxu0 %v77
  %v283 = vpop.f32.mrb[0].mxu0
  %v284 = vadd.f32 %v65, %v283
  %v285 = vpop.f32.mrb[0].mxu0
  %286 = vmatprep.mubr.f32.mxu0 0.0
  %287 = vmatmul.mubr.f32.gmra.mrb[0].mxu0 %v80
  %v288 = vpop.f32.mrb[0].mxu0
  %v289 = vadd.f32 %v65, %v288
  %v290 = vpop.f32.mrb[0].mxu0
  %291 = vmatprep.mubr.f32.mxu0 0.0
  %292 = vmatmul.mubr.f32.gmra.mrb[0].mxu0 %v83
  %v293 = vpop.f32.mrb[0].mxu0
  %v294 = vadd.f32 %v65, %v293
  %v295 = vpop.f32.mrb[0].mxu0
  %296 = vmatprep.mubr.f32.mxu0 0.0
  %297 = vmatmul.mubr.f32.gmra.mrb[0].mxu0 %v86
  %v298 = vpop.f32.mrb[0].mxu0
  %v299 = vadd.f32 %v65, %v298
  %v300 = vpop.f32.mrb[0].mxu0
  %301 = vmatprep.mubr.f32.mxu0 0.0
  %302 = vmatmul.mubr.f32.gmra.mrb[0].mxu0 %v89
  %v303 = vpop.f32.mrb[0].mxu0
  %v304 = vadd.f32 %v65, %v303
  %v305 = vpop.f32.mrb[0].mxu0
  %306 = vmatprep.mubr.f32.mxu0 0.0
  %307 = vmatmul.mubr.f32.gmra.mrb[0].mxu0 %v92
  %v308 = vpop.f32.mrb[0].mxu0
  %v309 = vadd.f32 %v65, %v308
  %v310 = vpop.f32.mrb[0].mxu0
  %311 = vdwg.mxu0
  %312 = vst [vmem:[#allocation2] sm:$0xff] %v161
  %313 = vst [vmem:[#allocation2 + $0x8] sm:$0xff] %v163
  %314 = vst [vmem:[#allocation2 + $0x10] sm:$0xff] %v274
  %315 = vst [vmem:[#allocation2 + $0x18] sm:$0xff] %v167
  %316 = vst [vmem:[#allocation2 + $0x20] sm:$0xff] %v169
  %317 = vst [vmem:[#allocation2 + $0x28] sm:$0xff] %v279
  %318 = vst [vmem:[#allocation2 + $0x30] sm:$0xff] %v173
  %319 = vst [vmem:[#allocation2 + $0x38] sm:$0xff] %v175
  %320 = vst [vmem:[#allocation2 + $0x40] sm:$0xff] %v284
  %321 = vst [vmem:[#allocation2 + $0x48] sm:$0xff] %v179
  %322 = vst [vmem:[#allocation2 + $0x50] sm:$0xff] %v181
  %323 = vst [vmem:[#allocation2 + $0x58] sm:$0xff] %v289
  %324 = vst [vmem:[#allocation2 + $0x60] sm:$0xff] %v185
  %325 = vst [vmem:[#allocation2 + $0x68] sm:$0xff] %v187
  %326 = vst [vmem:[#allocation2 + $0x70] sm:$0xff] %v294
  %327 = vst [vmem:[#allocation2 + $0x78] sm:$0xff] %v191
  %328 = vst [vmem:[#allocation2 + $0x80] sm:$0xff] %v193
  %329 = vst [vmem:[#allocation2 + $0x88] sm:$0xff] %v299
  %330 = vst [vmem:[#allocation2 + $0x90] sm:$0xff] %v197
  %331 = vst [vmem:[#allocation2 + $0x98] sm:$0xff] %v199
  %332 = vst [vmem:[#allocation2 + $0xa0] sm:$0xff] %v304
  %333 = vst [vmem:[#allocation2 + $0xa8] sm:$0xff] %v203
  %334 = vst [vmem:[#allocation2 + $0xb0] sm:$0xff] %v205
  %335 = vst [vmem:[#allocation2 + $0xb8] sm:$0xff] %v309
  %v336 = vld [vmem:[%s1] sm:$0xff]
  %v337 = vld [vmem:[%s4] sm:$0xff]
  %v338 = vld [vmem:[%s4 + $0x8] sm:$0xff]
  %v339 = vld [vmem:[%s4 + $0x10] sm:$0xff]
  %v340 = vld [vmem:[%s4 + $0x18] sm:$0xff]
  %v341 = vld [vmem:[%s4 + $0x20] sm:$0xff]
  %v342 = vld [vmem:[%s4 + $0x28] sm:$0xff]
  %v343 = vld [vmem:[%s4 + $0x30] sm:$0xff]
  %v344 = vld [vmem:[%s4 + $0x38] sm:$0xff]
  %v345 = vld [vmem:[%s4 + $0x40] sm:$0xff]
  %v346 = vld [vmem:[%s4 + $0x48] sm:$0xff]
  %v347 = vld [vmem:[%s4 + $0x50] sm:$0xff]
  %v348 = vld [vmem:[%s4 + $0x58] sm:$0xff]
  %v349 = vld [vmem:[%s4 + $0x60] sm:$0xff]
  %v350 = vld [vmem:[%s4 + $0x68] sm:$0xff]
  %v351 = vld [vmem:[%s4 + $0x70] sm:$0xff]
  %v352 = vld [vmem:[%s4 + $0x78] sm:$0xff]
  %v353 = vld [vmem:[%s4 + $0x80] sm:$0xff]
  %v354 = vld [vmem:[%s4 + $0x88] sm:$0xff]
  %v355 = vld [vmem:[%s4 + $0x90] sm:$0xff]
  %v356 = vld [vmem:[%s4 + $0x98] sm:$0xff]
  %v357 = vld [vmem:[%s4 + $0xa0] sm:$0xff]
  %v358 = vld [vmem:[%s4 + $0xa8] sm:$0xff]
  %v359 = vld [vmem:[%s4 + $0xb0] sm:$0xff]
  %v360 = vld [vmem:[%s4 + $0xb8] sm:$0xff]
  %v361 = vld [vmem:[%s4 + $0xc0] sm:$0xff]
  %v362 = vld [vmem:[%s4 + $0xc8] sm:$0xff]
  %v363 = vld [vmem:[%s4 + $0xd0] sm:$0xff]
  %v364 = vld [vmem:[%s4 + $0xd8] sm:$0xff]
  %v365 = vld [vmem:[%s4 + $0xe0] sm:$0xff]
  %v366 = vld [vmem:[%s4 + $0xe8] sm:$0xff]
  %v367 = vld [vmem:[%s4 + $0xf0] sm:$0xff]
  %v368 = vld [vmem:[%s4 + $0xf8] sm:$0xff]
  %v369 = vld [vmem:[%s4 + $0x100] sm:$0xff]
  %v370 = vld [vmem:[%s4 + $0x108] sm:$0xff]
  %v371 = vld [vmem:[%s4 + $0x110] sm:$0xff]
  %v372 = vld [vmem:[%s4 + $0x118] sm:$0xff]
  %v373 = vld [vmem:[%s4 + $0x120] sm:$0xff]
  %v374 = vld [vmem:[%s4 + $0x128] sm:$0xff]
  %v375 = vld [vmem:[%s4 + $0x130] sm:$0xff]
  %v376 = vld [vmem:[%s4 + $0x138] sm:$0xff]
  %v377 = vld [vmem:[%s4 + $0x140] sm:$0xff]
  %v378 = vld [vmem:[%s4 + $0x148] sm:$0xff]
  %v379 = vld [vmem:[%s4 + $0x150] sm:$0xff]
  %v380 = vld [vmem:[%s4 + $0x158] sm:$0xff]
  %v381 = vld [vmem:[%s4 + $0x160] sm:$0xff]
  %v382 = vld [vmem:[%s4 + $0x168] sm:$0xff]
  %v383 = vld [vmem:[%s4 + $0x170] sm:$0xff]
  %v384 = vld [vmem:[%s4 + $0x178] sm:$0xff]
  %v385 = vld [vmem:[%s6] sm:$0x7]
  %v386 = vld [vmem:[#allocation2] sm:$0xff]
  %v387 = vld [vmem:[#allocation2 + $0x8] sm:$0xff]
  %v388 = vld [vmem:[#allocation2 + $0x10] sm:$0xff]
  %v390 = vlaneseq
  %v391 = vshrl.u32 %v390, 7
  %v392 = vsub.s32 0, %v391
  %v393 = vrot.slane %v385, %v392
  %v394 = vlaneseq
  %v395 = vshrl.u32 %v394, 7
  %v396 = vsub.s32 1, %v395
  %v397 = vrot.slane %v385, %v396
  %v398 = vlaneseq
  %v399 = vshrl.u32 %v398, 7
  %v400 = vsub.s32 2, %v399
  %v401 = vrot.slane %v385, %v400
  %405 = vmatprep.subr.mxu0 %v338
  %406 = vmatpush1.msra.mxu0 %v337
  %407 = vmatprep.subr.mxu0 %v341
  %408 = vmatpush1.msra.mxu0 %v340
  %409 = vmatprep.subr.mxu0 %v344
  %410 = vmatpush1.msra.mxu0 %v343
  %411 = vmatprep.subr.mxu0 %v347
  %412 = vmatpush1.msra.mxu0 %v346
  %413 = vmatprep.subr.mxu0 %v350
  %414 = vmatpush1.msra.mxu0 %v349
  %415 = vmatprep.subr.mxu0 %v353
  %416 = vmatpush1.msra.mxu0 %v352
  %417 = vmatprep.subr.mxu0 %v356
  %418 = vmatpush1.msra.mxu0 %v355
  %419 = vmatprep.subr.mxu0 %v359
  %420 = vmatpush1.msra.mxu0 %v358
  %421 = vmatprep.subr.mxu0 %v362
  %422 = vmatpush1.msra.mxu0 %v361
  %423 = vmatprep.subr.mxu0 %v365
  %424 = vmatpush1.msra.mxu0 %v364
  %425 = vmatprep.subr.mxu0 %v368
  %426 = vmatpush1.msra.mxu0 %v367
  %427 = vmatprep.subr.mxu0 %v371
  %428 = vmatpush1.msra.mxu0 %v370
  %429 = vmatprep.subr.mxu0 %v374
  %430 = vmatpush1.msra.mxu0 %v373
  %431 = vmatprep.subr.mxu0 %v377
  %432 = vmatpush1.msra.mxu0 %v376
  %433 = vmatprep.subr.mxu0 %v380
  %434 = vmatpush1.msra.mxu0 %v379
  %435 = vmatprep.subr.mxu0 %v383
  %436 = vmatpush1.msra.mxu0 %v382
  %437 = vmatprep.subr.mxu0 0.0
  %438 = vmatpush1.msra.mxu0 0.0
  %439 = vmatprep.subr.mxu0 0.0
  %440 = vmatpush1.msra.mxu0 0.0
  %441 = vmatprep.subr.mxu0 0.0
  %442 = vmatpush1.msra.mxu0 0.0
  %443 = vmatprep.subr.mxu0 0.0
  %444 = vmatpush1.msra.mxu0 0.0
  %445 = vmatprep.subr.mxu0 0.0
  %446 = vmatpush1.msra.mxu0 0.0
  %447 = vmatprep.subr.mxu0 0.0
  %448 = vmatpush1.msra.mxu0 0.0
  %449 = vmatprep.subr.mxu0 0.0
  %450 = vmatpush1.msra.mxu0 0.0
  %451 = vmatprep.subr.mxu0 0.0
  %452 = vmatpush1.msra.mxu0 0.0
  %453 = vmatprep.subr.mxu0 0.0
  %454 = vmatpush1.msra.mxu0 0.0
  %455 = vmatprep.subr.mxu0 0.0
  %456 = vmatpush1.msra.mxu0 0.0
  %457 = vmatprep.subr.mxu0 0.0
  %458 = vmatpush1.msra.mxu0 0.0
  %459 = vmatprep.subr.mxu0 0.0
  %460 = vmatpush1.msra.mxu0 0.0
  %461 = vmatprep.subr.mxu0 0.0
  %462 = vmatpush1.msra.mxu0 0.0
  %463 = vmatprep.subr.mxu0 0.0
  %464 = vmatpush1.msra.mxu0 0.0
  %465 = vmatprep.subr.mxu0 0.0
  %466 = vmatpush1.msra.mxu0 0.0
  %467 = vmatprep.subr.mxu0 0.0
  %468 = vmatpush1.msra.mxu0 0.0
  %469 = vmatprep.mubr.f32.mxu0 0.0
  %470 = vmatmul.mubr.f32.gmra.mrb[0].mxu0 0.0
  %v471 = vpop.f32.mrb[0].mxu0
  %v472 = vadd.f32 %v393, %v471
  %v473 = vpop.f32.mrb[0].mxu0
  %v474 = vadd.f32 %v397, %v473
  %475 = vdwg.mxu0
  %476 = vmatprep.subr.mxu0 0.0
  %477 = vmatpush1.msra.mxu0 %v339
  %478 = vmatprep.subr.mxu0 0.0
  %479 = vmatpush1.msra.mxu0 %v342
  %480 = vmatprep.subr.mxu0 0.0
  %481 = vmatpush1.msra.mxu0 %v345
  %482 = vmatprep.subr.mxu0 0.0
  %483 = vmatpush1.msra.mxu0 %v348
  %484 = vmatprep.subr.mxu0 0.0
  %485 = vmatpush1.msra.mxu0 %v351
  %486 = vmatprep.subr.mxu0 0.0
  %487 = vmatpush1.msra.mxu0 %v354
  %488 = vmatprep.subr.mxu0 0.0
  %489 = vmatpush1.msra.mxu0 %v357
  %490 = vmatprep.subr.mxu0 0.0
  %491 = vmatpush1.msra.mxu0 %v360
  %492 = vmatprep.subr.mxu0 0.0
  %493 = vmatpush1.msra.mxu0 %v363
  %494 = vmatprep.subr.mxu0 0.0
  %495 = vmatpush1.msra.mxu0 %v366
  %496 = vmatprep.subr.mxu0 0.0
  %497 = vmatpush1.msra.mxu0 %v369
  %498 = vmatprep.subr.mxu0 0.0
  %499 = vmatpush1.msra.mxu0 %v372
  %500 = vmatprep.subr.mxu0 0.0
  %501 = vmatpush1.msra.mxu0 %v375
  %502 = vmatprep.subr.mxu0 0.0
  %503 = vmatpush1.msra.mxu0 %v378
  %504 = vmatprep.subr.mxu0 0.0
  %505 = vmatpush1.msra.mxu0 %v381
  %506 = vmatprep.subr.mxu0 0.0
  %507 = vmatpush1.msra.mxu0 %v384
  %508 = vmatprep.subr.mxu0 0.0
  %509 = vmatpush1.msra.mxu0 0.0
  %510 = vmatprep.subr.mxu0 0.0
  %511 = vmatpush1.msra.mxu0 0.0
  %512 = vmatprep.subr.mxu0 0.0
  %513 = vmatpush1.msra.mxu0 0.0
  %514 = vmatprep.subr.mxu0 0.0
  %515 = vmatpush1.msra.mxu0 0.0
  %516 = vmatprep.subr.mxu0 0.0
  %517 = vmatpush1.msra.mxu0 0.0
  %518 = vmatprep.subr.mxu0 0.0
  %519 = vmatpush1.msra.mxu0 0.0
  %520 = vmatprep.subr.mxu0 0.0
  %521 = vmatpush1.msra.mxu0 0.0
  %522 = vmatprep.subr.mxu0 0.0
  %523 = vmatpush1.msra.mxu0 0.0
  %524 = vmatprep.subr.mxu0 0.0
  %525 = vmatpush1.msra.mxu0 0.0
  %526 = vmatprep.subr.mxu0 0.0
  %527 = vmatpush1.msra.mxu0 0.0
  %528 = vmatprep.subr.mxu0 0.0
  %529 = vmatpush1.msra.mxu0 0.0
  %530 = vmatprep.subr.mxu0 0.0
  %531 = vmatpush1.msra.mxu0 0.0
  %532 = vmatprep.subr.mxu0 0.0
  %533 = vmatpush1.msra.mxu0 0.0
  %534 = vmatprep.subr.mxu0 0.0
  %535 = vmatpush1.msra.mxu0 0.0
  %536 = vmatprep.subr.mxu0 0.0
  %537 = vmatpush1.msra.mxu0 0.0
  %538 = vmatprep.subr.mxu0 0.0
  %539 = vmatpush1.msra.mxu0 0.0
  %540 = vmatprep.mubr.f32.mxu0 0.0
  %541 = vmatmul.mubr.f32.gmra.mrb[0].mxu0 0.0
  %v542 = vpop.f32.mrb[0].mxu0
  %v543 = vadd.f32 %v401, %v542
  %v544 = vpop.f32.mrb[0].mxu0
  %545 = vdwg.mxu0
  %v546 = vadd.f32 %v386, %v472
  %v547 = vxor.u32 %v546, 2147483648
  %v548 = vmul.f32 %v547, 1.442695
  %v549 = vpow.pop %v548
  %v550 = vadd.f32 %v549, 1.0
  %v551 = vrcp.pop %v550
  %v552 = vmul.f32 1.0, %v551
  %v553 = vadd.f32 %v387, %v474
  %v554 = vxor.u32 %v553, 2147483648
  %v555 = vmul.f32 %v554, 1.442695
  %v556 = vpow.pop %v555
  %v557 = vadd.f32 %v556, 1.0
  %v558 = vrcp.pop %v557
  %v559 = vmul.f32 1.0, %v558
  %v560 = vmul.f32 %v552, %v543
  %v561 = vadd.f32 %v388, %v560
  %v562 = vtanh.pop %v561
  %v563 = vsub.f32 1.0, %v559
  %v564 = vmul.f32 %v563, %v562
  %v565 = vmul.f32 %v559, 0.0
  %v566 = vadd.f32 %v564, %v565
  %vm567 = vcmp.gt.s32.totalorder %v336, 0
  %v568 = vsel %vm567, 1, 0
  %569 = vset.pattern.permute.xlu0 0
  %570 = vperm.xlu0 %569, %v568
  %v571 = vpop.permute.xlu0 %570
  %vm572 = vcmp.eq.s32.totalorder %v571, 1
  %v573 = vsel %vm572, %v566, 0.0
  %s574 = scalar_lea.vmem [#allocation2], 24
  %v575 = vld [vmem:[%s574] sm:$0xff]
  %v576 = vld [vmem:[%s574 + $0x8] sm:$0xff]
  %v577 = vld [vmem:[%s574 + $0x10] sm:$0xff]
  %578 = vmatprep.subr.mxu0 %v338
  %579 = vmatpush1.msra.mxu0 %v337
  %580 = vmatprep.subr.mxu0 %v341
  %581 = vmatpush1.msra.mxu0 %v340
  %582 = vmatprep.subr.mxu0 %v344
  %583 = vmatpush1.msra.mxu0 %v343
  %584 = vmatprep.subr.mxu0 %v347
  %585 = vmatpush1.msra.mxu0 %v346
  %586 = vmatprep.subr.mxu0 %v350
  %587 = vmatpush1.msra.mxu0 %v349
  %588 = vmatprep.subr.mxu0 %v353
  %589 = vmatpush1.msra.mxu0 %v352
  %590 = vmatprep.subr.mxu0 %v356
  %591 = vmatpush1.msra.mxu0 %v355
  %592 = vmatprep.subr.mxu0 %v359
  %593 = vmatpush1.msra.mxu0 %v358
  %594 = vmatprep.subr.mxu0 %v362
  %595 = vmatpush1.msra.mxu0 %v361
  %596 = vmatprep.subr.mxu0 %v365
  %597 = vmatpush1.msra.mxu0 %v364
  %598 = vmatprep.subr.mxu0 %v368
  %599 = vmatpush1.msra.mxu0 %v367
  %600 = vmatprep.subr.mxu0 %v371
  %601 = vmatpush1.msra.mxu0 %v370
  %602 = vmatprep.subr.mxu0 %v374
  %603 = vmatpush1.msra.mxu0 %v373
  %604 = vmatprep.subr.mxu0 %v377
  %605 = vmatpush1.msra.mxu0 %v376
  %606 = vmatprep.subr.mxu0 %v380
  %607 = vmatpush1.msra.mxu0 %v379
  %608 = vmatprep.subr.mxu0 %v383
  %609 = vmatpush1.msra.mxu0 %v382
  %610 = vmatprep.subr.mxu0 0.0
  %611 = vmatpush1.msra.mxu0 0.0
  %612 = vmatprep.subr.mxu0 0.0
  %613 = vmatpush1.msra.mxu0 0.0
  %614 = vmatprep.subr.mxu0 0.0
  %615 = vmatpush1.msra.mxu0 0.0
  %616 = vmatprep.subr.mxu0 0.0
  %617 = vmatpush1.msra.mxu0 0.0
  %618 = vmatprep.subr.mxu0 0.0
  %619 = vmatpush1.msra.mxu0 0.0
  %620 = vmatprep.subr.mxu0 0.0
  %621 = vmatpush1.msra.mxu0 0.0
  %622 = vmatprep.subr.mxu0 0.0
  %623 = vmatpush1.msra.mxu0 0.0
  %624 = vmatprep.subr.mxu0 0.0
  %625 = vmatpush1.msra.mxu0 0.0
  %626 = vmatprep.subr.mxu0 0.0
  %627 = vmatpush1.msra.mxu0 0.0
  %628 = vmatprep.subr.mxu0 0.0
  %629 = vmatpush1.msra.mxu0 0.0
  %630 = vmatprep.subr.mxu0 0.0
  %631 = vmatpush1.msra.mxu0 0.0
  %632 = vmatprep.subr.mxu0 0.0
  %633 = vmatpush1.msra.mxu0 0.0
  %634 = vmatprep.subr.mxu0 0.0
  %635 = vmatpush1.msra.mxu0 0.0
  %636 = vmatprep.subr.mxu0 0.0
  %637 = vmatpush1.msra.mxu0 0.0
  %638 = vmatprep.subr.mxu0 0.0
  %639 = vmatpush1.msra.mxu0 0.0
  %640 = vmatprep.subr.mxu0 0.0
  %641 = vmatpush1.msra.mxu0 0.0
  %642 = vmatprep.mubr.f32.mxu0 0.0
  %643 = vmatmul.mubr.f32.gmra.mrb[0].mxu0 %v573
  %v644 = vpop.f32.mrb[0].mxu0
  %v645 = vadd.f32 %v393, %v644
  %v646 = vpop.f32.mrb[0].mxu0
  %v647 = vadd.f32 %v397, %v646
  %648 = vdwg.mxu0
  %649 = vmatprep.subr.mxu0 0.0
  %650 = vmatpush1.msra.mxu0 %v339
  %651 = vmatprep.subr.mxu0 0.0
  %652 = vmatpush1.msra.mxu0 %v342
  %653 = vmatprep.subr.mxu0 0.0
  %654 = vmatpush1.msra.mxu0 %v345
  %655 = vmatprep.subr.mxu0 0.0
  %656 = vmatpush1.msra.mxu0 %v348
  %657 = vmatprep.subr.mxu0 0.0
  %658 = vmatpush1.msra.mxu0 %v351
  %659 = vmatprep.subr.mxu0 0.0
  %660 = vmatpush1.msra.mxu0 %v354
  %661 = vmatprep.subr.mxu0 0.0
  %662 = vmatpush1.msra.mxu0 %v357
  %663 = vmatprep.subr.mxu0 0.0
  %664 = vmatpush1.msra.mxu0 %v360
  %665 = vmatprep.subr.mxu0 0.0
  %666 = vmatpush1.msra.mxu0 %v363
  %667 = vmatprep.subr.mxu0 0.0
  %668 = vmatpush1.msra.mxu0 %v366
  %669 = vmatprep.subr.mxu0 0.0
  %670 = vmatpush1.msra.mxu0 %v369
  %671 = vmatprep.subr.mxu0 0.0
  %672 = vmatpush1.msra.mxu0 %v372
  %673 = vmatprep.subr.mxu0 0.0
  %674 = vmatpush1.msra.mxu0 %v375
  %675 = vmatprep.subr.mxu0 0.0
  %676 = vmatpush1.msra.mxu0 %v378
  %677 = vmatprep.subr.mxu0 0.0
  %678 = vmatpush1.msra.mxu0 %v381
  %679 = vmatprep.subr.mxu0 0.0
  %680 = vmatpush1.msra.mxu0 %v384
  %681 = vmatprep.subr.mxu0 0.0
  %682 = vmatpush1.msra.mxu0 0.0
  %683 = vmatprep.subr.mxu0 0.0
  %684 = vmatpush1.msra.mxu0 0.0
  %685 = vmatprep.subr.mxu0 0.0
  %686 = vmatpush1.msra.mxu0 0.0
  %687 = vmatprep.subr.mxu0 0.0
  %688 = vmatpush1.msra.mxu0 0.0
  %689 = vmatprep.subr.mxu0 0.0
  %690 = vmatpush1.msra.mxu0 0.0
  %691 = vmatprep.subr.mxu0 0.0
  %692 = vmatpush1.msra.mxu0 0.0
  %693 = vmatprep.subr.mxu0 0.0
  %694 = vmatpush1.msra.mxu0 0.0
  %695 = vmatprep.subr.mxu0 0.0
  %696 = vmatpush1.msra.mxu0 0.0
  %697 = vmatprep.subr.mxu0 0.0
  %698 = vmatpush1.msra.mxu0 0.0
  %699 = vmatprep.subr.mxu0 0.0
  %700 = vmatpush1.msra.mxu0 0.0
  %701 = vmatprep.subr.mxu0 0.0
  %702 = vmatpush1.msra.mxu0 0.0
  %703 = vmatprep.subr.mxu0 0.0
  %704 = vmatpush1.msra.mxu0 0.0
  %705 = vmatprep.subr.mxu0 0.0
  %706 = vmatpush1.msra.mxu0 0.0
  %707 = vmatprep.subr.mxu0 0.0
  %708 = vmatpush1.msra.mxu0 0.0
  %709 = vmatprep.subr.mxu0 0.0
  %710 = vmatpush1.msra.mxu0 0.0
  %711 = vmatprep.subr.mxu0 0.0
  %712 = vmatpush1.msra.mxu0 0.0
  %713 = vmatprep.mubr.f32.mxu0 0.0
  %714 = vmatmul.mubr.f32.gmra.mrb[0].mxu0 %v573
  %v715 = vpop.f32.mrb[0].mxu0
  %v716 = vadd.f32 %v401, %v715
  %v717 = vpop.f32.mrb[0].mxu0
  %718 = vdwg.mxu0
  %v719 = vadd.f32 %v575, %v645
  %v720 = vxor.u32 %v719, 2147483648
  %v721 = vmul.f32 %v720, 1.442695
  %v722 = vpow.pop %v721
  %v723 = vadd.f32 %v722, 1.0
  %v724 = vrcp.pop %v723
  %v725 = vmul.f32 1.0, %v724
  %v726 = vadd.f32 %v576, %v647
  %v727 = vxor.u32 %v726, 2147483648
  %v728 = vmul.f32 %v727, 1.442695
  %v729 = vpow.pop %v728
  %v730 = vadd.f32 %v729, 1.0
  %v731 = vrcp.pop %v730
  %v732 = vmul.f32 1.0, %v731
  %v733 = vmul.f32 %v725, %v716
  %v734 = vadd.f32 %v577, %v733
  %v735 = vtanh.pop %v734
  %v736 = vsub.f32 1.0, %v732
  %v737 = vmul.f32 %v736, %v735
  %v738 = vmul.f32 %v732, %v573
  %v739 = vadd.f32 %v737, %v738
  %vm740 = vcmp.gt.s32.totalorder %v336, 1
  %v741 = vsel %vm740, 1, 0
  %742 = vset.pattern.permute.xlu0 0
  %743 = vperm.xlu0 %742, %v741
  %v744 = vpop.permute.xlu0 %743
  %vm745 = vcmp.eq.s32.totalorder %v744, 1
  %v746 = vsel %vm745, %v739, %v573
  %s747 = scalar_lea.vmem [#allocation2], 48
  %v748 = vld [vmem:[%s747] sm:$0xff]
  %v749 = vld [vmem:[%s747 + $0x8] sm:$0xff]
  %v750 = vld [vmem:[%s747 + $0x10] sm:$0xff]
  %751 = vmatprep.subr.mxu0 %v338
  %752 = vmatpush1.msra.mxu0 %v337
  %753 = vmatprep.subr.mxu0 %v341
  %754 = vmatpush1.msra.mxu0 %v340
  %755 = vmatprep.subr.mxu0 %v344
  %756 = vmatpush1.msra.mxu0 %v343
  %757 = vmatprep.subr.mxu0 %v347
  %758 = vmatpush1.msra.mxu0 %v346
  %759 = vmatprep.subr.mxu0 %v350
  %760 = vmatpush1.msra.mxu0 %v349
  %761 = vmatprep.subr.mxu0 %v353
  %762 = vmatpush1.msra.mxu0 %v352
  %763 = vmatprep.subr.mxu0 %v356
  %764 = vmatpush1.msra.mxu0 %v355
  %765 = vmatprep.subr.mxu0 %v359
  %766 = vmatpush1.msra.mxu0 %v358
  %767 = vmatprep.subr.mxu0 %v362
  %768 = vmatpush1.msra.mxu0 %v361
  %769 = vmatprep.subr.mxu0 %v365
  %770 = vmatpush1.msra.mxu0 %v364
  %771 = vmatprep.subr.mxu0 %v368
  %772 = vmatpush1.msra.mxu0 %v367
  %773 = vmatprep.subr.mxu0 %v371
  %774 = vmatpush1.msra.mxu0 %v370
  %775 = vmatprep.subr.mxu0 %v374
  %776 = vmatpush1.msra.mxu0 %v373
  %777 = vmatprep.subr.mxu0 %v377
  %778 = vmatpush1.msra.mxu0 %v376
  %779 = vmatprep.subr.mxu0 %v380
  %780 = vmatpush1.msra.mxu0 %v379
  %781 = vmatprep.subr.mxu0 %v383
  %782 = vmatpush1.msra.mxu0 %v382
  %783 = vmatprep.subr.mxu0 0.0
  %784 = vmatpush1.msra.mxu0 0.0
  %785 = vmatprep.subr.mxu0 0.0
  %786 = vmatpush1.msra.mxu0 0.0
  %787 = vmatprep.subr.mxu0 0.0
  %788 = vmatpush1.msra.mxu0 0.0
  %789 = vmatprep.subr.mxu0 0.0
  %790 = vmatpush1.msra.mxu0 0.0
  %791 = vmatprep.subr.mxu0 0.0
  %792 = vmatpush1.msra.mxu0 0.0
  %793 = vmatprep.subr.mxu0 0.0
  %794 = vmatpush1.msra.mxu0 0.0
  %795 = vmatprep.subr.mxu0 0.0
  %796 = vmatpush1.msra.mxu0 0.0
  %797 = vmatprep.subr.mxu0 0.0
  %798 = vmatpush1.msra.mxu0 0.0
  %799 = vmatprep.subr.mxu0 0.0
  %800 = vmatpush1.msra.mxu0 0.0
  %801 = vmatprep.subr.mxu0 0.0
  %802 = vmatpush1.msra.mxu0 0.0
  %803 = vmatprep.subr.mxu0 0.0
  %804 = vmatpush1.msra.mxu0 0.0
  %805 = vmatprep.subr.mxu0 0.0
  %806 = vmatpush1.msra.mxu0 0.0
  %807 = vmatprep.subr.mxu0 0.0
  %808 = vmatpush1.msra.mxu0 0.0
  %809 = vmatprep.subr.mxu0 0.0
  %810 = vmatpush1.msra.mxu0 0.0
  %811 = vmatprep.subr.mxu0 0.0
  %812 = vmatpush1.msra.mxu0 0.0
  %813 = vmatprep.subr.mxu0 0.0
  %814 = vmatpush1.msra.mxu0 0.0
  %815 = vmatprep.mubr.f32.mxu0 0.0
  %816 = vmatmul.mubr.f32.gmra.mrb[0].mxu0 %v746
  %v817 = vpop.f32.mrb[0].mxu0
  %v818 = vadd.f32 %v393, %v817
  %v819 = vpop.f32.mrb[0].mxu0
  %v820 = vadd.f32 %v397, %v819
  %821 = vdwg.mxu0
  %822 = vmatprep.subr.mxu0 0.0
  %823 = vmatpush1.msra.mxu0 %v339
  %824 = vmatprep.subr.mxu0 0.0
  %825 = vmatpush1.msra.mxu0 %v342
  %826 = vmatprep.subr.mxu0 0.0
  %827 = vmatpush1.msra.mxu0 %v345
  %828 = vmatprep.subr.mxu0 0.0
  %829 = vmatpush1.msra.mxu0 %v348
  %830 = vmatprep.subr.mxu0 0.0
  %831 = vmatpush1.msra.mxu0 %v351
  %832 = vmatprep.subr.mxu0 0.0
  %833 = vmatpush1.msra.mxu0 %v354
  %834 = vmatprep.subr.mxu0 0.0
  %835 = vmatpush1.msra.mxu0 %v357
  %836 = vmatprep.subr.mxu0 0.0
  %837 = vmatpush1.msra.mxu0 %v360
  %838 = vmatprep.subr.mxu0 0.0
  %839 = vmatpush1.msra.mxu0 %v363
  %840 = vmatprep.subr.mxu0 0.0
  %841 = vmatpush1.msra.mxu0 %v366
  %842 = vmatprep.subr.mxu0 0.0
  %843 = vmatpush1.msra.mxu0 %v369
  %844 = vmatprep.subr.mxu0 0.0
  %845 = vmatpush1.msra.mxu0 %v372
  %846 = vmatprep.subr.mxu0 0.0
  %847 = vmatpush1.msra.mxu0 %v375
  %848 = vmatprep.subr.mxu0 0.0
  %849 = vmatpush1.msra.mxu0 %v378
  %850 = vmatprep.subr.mxu0 0.0
  %851 = vmatpush1.msra.mxu0 %v381
  %852 = vmatprep.subr.mxu0 0.0
  %853 = vmatpush1.msra.mxu0 %v384
  %854 = vmatprep.subr.mxu0 0.0
  %855 = vmatpush1.msra.mxu0 0.0
  %856 = vmatprep.subr.mxu0 0.0
  %857 = vmatpush1.msra.mxu0 0.0
  %858 = vmatprep.subr.mxu0 0.0
  %859 = vmatpush1.msra.mxu0 0.0
  %860 = vmatprep.subr.mxu0 0.0
  %861 = vmatpush1.msra.mxu0 0.0
  %862 = vmatprep.subr.mxu0 0.0
  %863 = vmatpush1.msra.mxu0 0.0
  %864 = vmatprep.subr.mxu0 0.0
  %865 = vmatpush1.msra.mxu0 0.0
  %866 = vmatprep.subr.mxu0 0.0
  %867 = vmatpush1.msra.mxu0 0.0
  %868 = vmatprep.subr.mxu0 0.0
  %869 = vmatpush1.msra.mxu0 0.0
  %870 = vmatprep.subr.mxu0 0.0
  %871 = vmatpush1.msra.mxu0 0.0
  %872 = vmatprep.subr.mxu0 0.0
  %873 = vmatpush1.msra.mxu0 0.0
  %874 = vmatprep.subr.mxu0 0.0
  %875 = vmatpush1.msra.mxu0 0.0
  %876 = vmatprep.subr.mxu0 0.0
  %877 = vmatpush1.msra.mxu0 0.0
  %878 = vmatprep.subr.mxu0 0.0
  %879 = vmatpush1.msra.mxu0 0.0
  %880 = vmatprep.subr.mxu0 0.0
  %881 = vmatpush1.msra.mxu0 0.0
  %882 = vmatprep.subr.mxu0 0.0
  %883 = vmatpush1.msra.mxu0 0.0
  %884 = vmatprep.subr.mxu0 0.0
  %885 = vmatpush1.msra.mxu0 0.0
  %886 = vmatprep.mubr.f32.mxu0 0.0
  %887 = vmatmul.mubr.f32.gmra.mrb[0].mxu0 %v746
  %v888 = vpop.f32.mrb[0].mxu0
  %v889 = vadd.f32 %v401, %v888
  %v890 = vpop.f32.mrb[0].mxu0
  %891 = vdwg.mxu0
  %v892 = vadd.f32 %v748, %v818
  %v893 = vxor.u32 %v892, 2147483648
  %v894 = vmul.f32 %v893, 1.442695
  %v895 = vpow.pop %v894
  %v896 = vadd.f32 %v895, 1.0
  %v897 = vrcp.pop %v896
  %v898 = vmul.f32 1.0, %v897
  %v899 = vadd.f32 %v749, %v820
  %v900 = vxor.u32 %v899, 2147483648
  %v901 = vmul.f32 %v900, 1.442695
  %v902 = vpow.pop %v901
  %v903 = vadd.f32 %v902, 1.0
  %v904 = vrcp.pop %v903
  %v905 = vmul.f32 1.0, %v904
  %v906 = vmul.f32 %v898, %v889
  %v907 = vadd.f32 %v750, %v906
  %v908 = vtanh.pop %v907
  %v909 = vsub.f32 1.0, %v905
  %v910 = vmul.f32 %v909, %v908
  %v911 = vmul.f32 %v905, %v746
  %v912 = vadd.f32 %v910, %v911
  %vm913 = vcmp.gt.s32.totalorder %v336, 2
  %v914 = vsel %vm913, 1, 0
  %915 = vset.pattern.permute.xlu0 0
  %916 = vperm.xlu0 %915, %v914
  %v917 = vpop.permute.xlu0 %916
  %vm918 = vcmp.eq.s32.totalorder %v917, 1
  %v919 = vsel %vm918, %v912, %v746
  %s920 = scalar_lea.vmem [#allocation2], 72
  %v921 = vld [vmem:[%s920] sm:$0xff]
  %v922 = vld [vmem:[%s920 + $0x8] sm:$0xff]
  %v923 = vld [vmem:[%s920 + $0x10] sm:$0xff]
  %924 = vmatprep.subr.mxu0 %v338
  %925 = vmatpush1.msra.mxu0 %v337
  %926 = vmatprep.subr.mxu0 %v341
  %927 = vmatpush1.msra.mxu0 %v340
  %928 = vmatprep.subr.mxu0 %v344
  %929 = vmatpush1.msra.mxu0 %v343
  %930 = vmatprep.subr.mxu0 %v347
  %931 = vmatpush1.msra.mxu0 %v346
  %932 = vmatprep.subr.mxu0 %v350
  %933 = vmatpush1.msra.mxu0 %v349
  %934 = vmatprep.subr.mxu0 %v353
  %935 = vmatpush1.msra.mxu0 %v352
  %936 = vmatprep.subr.mxu0 %v356
  %937 = vmatpush1.msra.mxu0 %v355
  %938 = vmatprep.subr.mxu0 %v359
  %939 = vmatpush1.msra.mxu0 %v358
  %940 = vmatprep.subr.mxu0 %v362
  %941 = vmatpush1.msra.mxu0 %v361
  %942 = vmatprep.subr.mxu0 %v365
  %943 = vmatpush1.msra.mxu0 %v364
  %944 = vmatprep.subr.mxu0 %v368
  %945 = vmatpush1.msra.mxu0 %v367
  %946 = vmatprep.subr.mxu0 %v371
  %947 = vmatpush1.msra.mxu0 %v370
  %948 = vmatprep.subr.mxu0 %v374
  %949 = vmatpush1.msra.mxu0 %v373
  %950 = vmatprep.subr.mxu0 %v377
  %951 = vmatpush1.msra.mxu0 %v376
  %952 = vmatprep.subr.mxu0 %v380
  %953 = vmatpush1.msra.mxu0 %v379
  %954 = vmatprep.subr.mxu0 %v383
  %955 = vmatpush1.msra.mxu0 %v382
  %956 = vmatprep.subr.mxu0 0.0
  %957 = vmatpush1.msra.mxu0 0.0
  %958 = vmatprep.subr.mxu0 0.0
  %959 = vmatpush1.msra.mxu0 0.0
  %960 = vmatprep.subr.mxu0 0.0
  %961 = vmatpush1.msra.mxu0 0.0
  %962 = vmatprep.subr.mxu0 0.0
  %963 = vmatpush1.msra.mxu0 0.0
  %964 = vmatprep.subr.mxu0 0.0
  %965 = vmatpush1.msra.mxu0 0.0
  %966 = vmatprep.subr.mxu0 0.0
  %967 = vmatpush1.msra.mxu0 0.0
  %968 = vmatprep.subr.mxu0 0.0
  %969 = vmatpush1.msra.mxu0 0.0
  %970 = vmatprep.subr.mxu0 0.0
  %971 = vmatpush1.msra.mxu0 0.0
  %972 = vmatprep.subr.mxu0 0.0
  %973 = vmatpush1.msra.mxu0 0.0
  %974 = vmatprep.subr.mxu0 0.0
  %975 = vmatpush1.msra.mxu0 0.0
  %976 = vmatprep.subr.mxu0 0.0
  %977 = vmatpush1.msra.mxu0 0.0
  %978 = vmatprep.subr.mxu0 0.0
  %979 = vmatpush1.msra.mxu0 0.0
  %980 = vmatprep.subr.mxu0 0.0
  %981 = vmatpush1.msra.mxu0 0.0
  %982 = vmatprep.subr.mxu0 0.0
  %983 = vmatpush1.msra.mxu0 0.0
  %984 = vmatprep.subr.mxu0 0.0
  %985 = vmatpush1.msra.mxu0 0.0
  %986 = vmatprep.subr.mxu0 0.0
  %987 = vmatpush1.msra.mxu0 0.0
  %988 = vmatprep.mubr.f32.mxu0 0.0
  %989 = vmatmul.mubr.f32.gmra.mrb[0].mxu0 %v919
  %v990 = vpop.f32.mrb[0].mxu0
  %v991 = vadd.f32 %v393, %v990
  %v992 = vpop.f32.mrb[0].mxu0
  %v993 = vadd.f32 %v397, %v992
  %994 = vdwg.mxu0
  %995 = vmatprep.subr.mxu0 0.0
  %996 = vmatpush1.msra.mxu0 %v339
  %997 = vmatprep.subr.mxu0 0.0
  %998 = vmatpush1.msra.mxu0 %v342
  %999 = vmatprep.subr.mxu0 0.0
  %1000 = vmatpush1.msra.mxu0 %v345
  %1001 = vmatprep.subr.mxu0 0.0
  %1002 = vmatpush1.msra.mxu0 %v348
  %1003 = vmatprep.subr.mxu0 0.0
  %1004 = vmatpush1.msra.mxu0 %v351
  %1005 = vmatprep.subr.mxu0 0.0
  %1006 = vmatpush1.msra.mxu0 %v354
  %1007 = vmatprep.subr.mxu0 0.0
  %1008 = vmatpush1.msra.mxu0 %v357
  %1009 = vmatprep.subr.mxu0 0.0
  %1010 = vmatpush1.msra.mxu0 %v360
  %1011 = vmatprep.subr.mxu0 0.0
  %1012 = vmatpush1.msra.mxu0 %v363
  %1013 = vmatprep.subr.mxu0 0.0
  %1014 = vmatpush1.msra.mxu0 %v366
  %1015 = vmatprep.subr.mxu0 0.0
  %1016 = vmatpush1.msra.mxu0 %v369
  %1017 = vmatprep.subr.mxu0 0.0
  %1018 = vmatpush1.msra.mxu0 %v372
  %1019 = vmatprep.subr.mxu0 0.0
  %1020 = vmatpush1.msra.mxu0 %v375
  %1021 = vmatprep.subr.mxu0 0.0
  %1022 = vmatpush1.msra.mxu0 %v378
  %1023 = vmatprep.subr.mxu0 0.0
  %1024 = vmatpush1.msra.mxu0 %v381
  %1025 = vmatprep.subr.mxu0 0.0
  %1026 = vmatpush1.msra.mxu0 %v384
  %1027 = vmatprep.subr.mxu0 0.0
  %1028 = vmatpush1.msra.mxu0 0.0
  %1029 = vmatprep.subr.mxu0 0.0
  %1030 = vmatpush1.msra.mxu0 0.0
  %1031 = vmatprep.subr.mxu0 0.0
  %1032 = vmatpush1.msra.mxu0 0.0
  %1033 = vmatprep.subr.mxu0 0.0
  %1034 = vmatpush1.msra.mxu0 0.0
  %1035 = vmatprep.subr.mxu0 0.0
  %1036 = vmatpush1.msra.mxu0 0.0
  %1037 = vmatprep.subr.mxu0 0.0
  %1038 = vmatpush1.msra.mxu0 0.0
  %1039 = vmatprep.subr.mxu0 0.0
  %1040 = vmatpush1.msra.mxu0 0.0
  %1041 = vmatprep.subr.mxu0 0.0
  %1042 = vmatpush1.msra.mxu0 0.0
  %1043 = vmatprep.subr.mxu0 0.0
  %1044 = vmatpush1.msra.mxu0 0.0
  %1045 = vmatprep.subr.mxu0 0.0
  %1046 = vmatpush1.msra.mxu0 0.0
  %1047 = vmatprep.subr.mxu0 0.0
  %1048 = vmatpush1.msra.mxu0 0.0
  %1049 = vmatprep.subr.mxu0 0.0
  %1050 = vmatpush1.msra.mxu0 0.0
  %1051 = vmatprep.subr.mxu0 0.0
  %1052 = vmatpush1.msra.mxu0 0.0
  %1053 = vmatprep.subr.mxu0 0.0
  %1054 = vmatpush1.msra.mxu0 0.0
  %1055 = vmatprep.subr.mxu0 0.0
  %1056 = vmatpush1.msra.mxu0 0.0
  %1057 = vmatprep.subr.mxu0 0.0
  %1058 = vmatpush1.msra.mxu0 0.0
  %1059 = vmatprep.mubr.f32.mxu0 0.0
  %1060 = vmatmul.mubr.f32.gmra.mrb[0].mxu0 %v919
  %v1061 = vpop.f32.mrb[0].mxu0
  %v1062 = vadd.f32 %v401, %v1061
  %v1063 = vpop.f32.mrb[0].mxu0
  %1064 = vdwg.mxu0
  %v1065 = vadd.f32 %v921, %v991
  %v1066 = vxor.u32 %v1065, 2147483648
  %v1067 = vmul.f32 %v1066, 1.442695
  %v1068 = vpow.pop %v1067
  %v1069 = vadd.f32 %v1068, 1.0
  %v1070 = vrcp.pop %v1069
  %v1071 = vmul.f32 1.0, %v1070
  %v1072 = vadd.f32 %v922, %v993
  %v1073 = vxor.u32 %v1072, 2147483648
  %v1074 = vmul.f32 %v1073, 1.442695
  %v1075 = vpow.pop %v1074
  %v1076 = vadd.f32 %v1075, 1.0
  %v1077 = vrcp.pop %v1076
  %v1078 = vmul.f32 1.0, %v1077
  %v1079 = vmul.f32 %v1071, %v1062
  %v1080 = vadd.f32 %v923, %v1079
  %v1081 = vtanh.pop %v1080
  %v1082 = vsub.f32 1.0, %v1078
  %v1083 = vmul.f32 %v1082, %v1081
  %v1084 = vmul.f32 %v1078, %v919
  %v1085 = vadd.f32 %v1083, %v1084
  %vm1086 = vcmp.gt.s32.totalorder %v336, 3
  %v1087 = vsel %vm1086, 1, 0
  %1088 = vset.pattern.permute.xlu0 0
  %1089 = vperm.xlu0 %1088, %v1087
  %v1090 = vpop.permute.xlu0 %1089
  %vm1091 = vcmp.eq.s32.totalorder %v1090, 1
  %v1092 = vsel %vm1091, %v1085, %v919
  %s1093 = scalar_lea.vmem [#allocation2], 96
  %v1094 = vld [vmem:[%s1093] sm:$0xff]
  %v1095 = vld [vmem:[%s1093 + $0x8] sm:$0xff]
  %v1096 = vld [vmem:[%s1093 + $0x10] sm:$0xff]
  %1097 = vmatprep.subr.mxu0 %v338
  %1098 = vmatpush1.msra.mxu0 %v337
  %1099 = vmatprep.subr.mxu0 %v341
  %1100 = vmatpush1.msra.mxu0 %v340
  %1101 = vmatprep.subr.mxu0 %v344
  %1102 = vmatpush1.msra.mxu0 %v343
  %1103 = vmatprep.subr.mxu0 %v347
  %1104 = vmatpush1.msra.mxu0 %v346
  %1105 = vmatprep.subr.mxu0 %v350
  %1106 = vmatpush1.msra.mxu0 %v349
  %1107 = vmatprep.subr.mxu0 %v353
  %1108 = vmatpush1.msra.mxu0 %v352
  %1109 = vmatprep.subr.mxu0 %v356
  %1110 = vmatpush1.msra.mxu0 %v355
  %1111 = vmatprep.subr.mxu0 %v359
  %1112 = vmatpush1.msra.mxu0 %v358
  %1113 = vmatprep.subr.mxu0 %v362
  %1114 = vmatpush1.msra.mxu0 %v361
  %1115 = vmatprep.subr.mxu0 %v365
  %1116 = vmatpush1.msra.mxu0 %v364
  %1117 = vmatprep.subr.mxu0 %v368
  %1118 = vmatpush1.msra.mxu0 %v367
  %1119 = vmatprep.subr.mxu0 %v371
  %1120 = vmatpush1.msra.mxu0 %v370
  %1121 = vmatprep.subr.mxu0 %v374
  %1122 = vmatpush1.msra.mxu0 %v373
  %1123 = vmatprep.subr.mxu0 %v377
  %1124 = vmatpush1.msra.mxu0 %v376
  %1125 = vmatprep.subr.mxu0 %v380
  %1126 = vmatpush1.msra.mxu0 %v379
  %1127 = vmatprep.subr.mxu0 %v383
  %1128 = vmatpush1.msra.mxu0 %v382
  %1129 = vmatprep.subr.mxu0 0.0
  %1130 = vmatpush1.msra.mxu0 0.0
  %1131 = vmatprep.subr.mxu0 0.0
  %1132 = vmatpush1.msra.mxu0 0.0
  %1133 = vmatprep.subr.mxu0 0.0
  %1134 = vmatpush1.msra.mxu0 0.0
  %1135 = vmatprep.subr.mxu0 0.0
  %1136 = vmatpush1.msra.mxu0 0.0
  %1137 = vmatprep.subr.mxu0 0.0
  %1138 = vmatpush1.msra.mxu0 0.0
  %1139 = vmatprep.subr.mxu0 0.0
  %1140 = vmatpush1.msra.mxu0 0.0
  %1141 = vmatprep.subr.mxu0 0.0
  %1142 = vmatpush1.msra.mxu0 0.0
  %1143 = vmatprep.subr.mxu0 0.0
  %1144 = vmatpush1.msra.mxu0 0.0
  %1145 = vmatprep.subr.mxu0 0.0
  %1146 = vmatpush1.msra.mxu0 0.0
  %1147 = vmatprep.subr.mxu0 0.0
  %1148 = vmatpush1.msra.mxu0 0.0
  %1149 = vmatprep.subr.mxu0 0.0
  %1150 = vmatpush1.msra.mxu0 0.0
  %1151 = vmatprep.subr.mxu0 0.0
  %1152 = vmatpush1.msra.mxu0 0.0
  %1153 = vmatprep.subr.mxu0 0.0
  %1154 = vmatpush1.msra.mxu0 0.0
  %1155 = vmatprep.subr.mxu0 0.0
  %1156 = vmatpush1.msra.mxu0 0.0
  %1157 = vmatprep.subr.mxu0 0.0
  %1158 = vmatpush1.msra.mxu0 0.0
  %1159 = vmatprep.subr.mxu0 0.0
  %1160 = vmatpush1.msra.mxu0 0.0
  %1161 = vmatprep.mubr.f32.mxu0 0.0
  %1162 = vmatmul.mubr.f32.gmra.mrb[0].mxu0 %v1092
  %v1163 = vpop.f32.mrb[0].mxu0
  %v1164 = vadd.f32 %v393, %v1163
  %v1165 = vpop.f32.mrb[0].mxu0
  %v1166 = vadd.f32 %v397, %v1165
  %1167 = vdwg.mxu0
  %1168 = vmatprep.subr.mxu0 0.0
  %1169 = vmatpush1.msra.mxu0 %v339
  %1170 = vmatprep.subr.mxu0 0.0
  %1171 = vmatpush1.msra.mxu0 %v342
  %1172 = vmatprep.subr.mxu0 0.0
  %1173 = vmatpush1.msra.mxu0 %v345
  %1174 = vmatprep.subr.mxu0 0.0
  %1175 = vmatpush1.msra.mxu0 %v348
  %1176 = vmatprep.subr.mxu0 0.0
  %1177 = vmatpush1.msra.mxu0 %v351
  %1178 = vmatprep.subr.mxu0 0.0
  %1179 = vmatpush1.msra.mxu0 %v354
  %1180 = vmatprep.subr.mxu0 0.0
  %1181 = vmatpush1.msra.mxu0 %v357
  %1182 = vmatprep.subr.mxu0 0.0
  %1183 = vmatpush1.msra.mxu0 %v360
  %1184 = vmatprep.subr.mxu0 0.0
  %1185 = vmatpush1.msra.mxu0 %v363
  %1186 = vmatprep.subr.mxu0 0.0
  %1187 = vmatpush1.msra.mxu0 %v366
  %1188 = vmatprep.subr.mxu0 0.0
  %1189 = vmatpush1.msra.mxu0 %v369
  %1190 = vmatprep.subr.mxu0 0.0
  %1191 = vmatpush1.msra.mxu0 %v372
  %1192 = vmatprep.subr.mxu0 0.0
  %1193 = vmatpush1.msra.mxu0 %v375
  %1194 = vmatprep.subr.mxu0 0.0
  %1195 = vmatpush1.msra.mxu0 %v378
  %1196 = vmatprep.subr.mxu0 0.0
  %1197 = vmatpush1.msra.mxu0 %v381
  %1198 = vmatprep.subr.mxu0 0.0
  %1199 = vmatpush1.msra.mxu0 %v384
  %1200 = vmatprep.subr.mxu0 0.0
  %1201 = vmatpush1.msra.mxu0 0.0
  %1202 = vmatprep.subr.mxu0 0.0
  %1203 = vmatpush1.msra.mxu0 0.0
  %1204 = vmatprep.subr.mxu0 0.0
  %1205 = vmatpush1.msra.mxu0 0.0
  %1206 = vmatprep.subr.mxu0 0.0
  %1207 = vmatpush1.msra.mxu0 0.0
  %1208 = vmatprep.subr.mxu0 0.0
  %1209 = vmatpush1.msra.mxu0 0.0
  %1210 = vmatprep.subr.mxu0 0.0
  %1211 = vmatpush1.msra.mxu0 0.0
  %1212 = vmatprep.subr.mxu0 0.0
  %1213 = vmatpush1.msra.mxu0 0.0
  %1214 = vmatprep.subr.mxu0 0.0
  %1215 = vmatpush1.msra.mxu0 0.0
  %1216 = vmatprep.subr.mxu0 0.0
  %1217 = vmatpush1.msra.mxu0 0.0
  %1218 = vmatprep.subr.mxu0 0.0
  %1219 = vmatpush1.msra.mxu0 0.0
  %1220 = vmatprep.subr.mxu0 0.0
  %1221 = vmatpush1.msra.mxu0 0.0
  %1222 = vmatprep.subr.mxu0 0.0
  %1223 = vmatpush1.msra.mxu0 0.0
  %1224 = vmatprep.subr.mxu0 0.0
  %1225 = vmatpush1.msra.mxu0 0.0
  %1226 = vmatprep.subr.mxu0 0.0
  %1227 = vmatpush1.msra.mxu0 0.0
  %1228 = vmatprep.subr.mxu0 0.0
  %1229 = vmatpush1.msra.mxu0 0.0
  %1230 = vmatprep.subr.mxu0 0.0
  %1231 = vmatpush1.msra.mxu0 0.0
  %1232 = vmatprep.mubr.f32.mxu0 0.0
  %1233 = vmatmul.mubr.f32.gmra.mrb[0].mxu0 %v1092
  %v1234 = vpop.f32.mrb[0].mxu0
  %v1235 = vadd.f32 %v401, %v1234
  %v1236 = vpop.f32.mrb[0].mxu0
  %1237 = vdwg.mxu0
  %v1238 = vadd.f32 %v1094, %v1164
  %v1239 = vxor.u32 %v1238, 2147483648
  %v1240 = vmul.f32 %v1239, 1.442695
  %v1241 = vpow.pop %v1240
  %v1242 = vadd.f32 %v1241, 1.0
  %v1243 = vrcp.pop %v1242
  %v1244 = vmul.f32 1.0, %v1243
  %v1245 = vadd.f32 %v1095, %v1166
  %v1246 = vxor.u32 %v1245, 2147483648
  %v1247 = vmul.f32 %v1246, 1.442695
  %v1248 = vpow.pop %v1247
  %v1249 = vadd.f32 %v1248, 1.0
  %v1250 = vrcp.pop %v1249
  %v1251 = vmul.f32 1.0, %v1250
  %v1252 = vmul.f32 %v1244, %v1235
  %v1253 = vadd.f32 %v1096, %v1252
  %v1254 = vtanh.pop %v1253
  %v1255 = vsub.f32 1.0, %v1251
  %v1256 = vmul.f32 %v1255, %v1254
  %v1257 = vmul.f32 %v1251, %v1092
  %v1258 = vadd.f32 %v1256, %v1257
  %vm1259 = vcmp.gt.s32.totalorder %v336, 4
  %v1260 = vsel %vm1259, 1, 0
  %1261 = vset.pattern.permute.xlu0 0
  %1262 = vperm.xlu0 %1261, %v1260
  %v1263 = vpop.permute.xlu0 %1262
  %vm1264 = vcmp.eq.s32.totalorder %v1263, 1
  %v1265 = vsel %vm1264, %v1258, %v1092
  %s1266 = scalar_lea.vmem [#allocation2], 120
  %v1267 = vld [vmem:[%s1266] sm:$0xff]
  %v1268 = vld [vmem:[%s1266 + $0x8] sm:$0xff]
  %v1269 = vld [vmem:[%s1266 + $0x10] sm:$0xff]
  %1270 = vmatprep.subr.mxu0 %v338
  %1271 = vmatpush1.msra.mxu0 %v337
  %1272 = vmatprep.subr.mxu0 %v341
  %1273 = vmatpush1.msra.mxu0 %v340
  %1274 = vmatprep.subr.mxu0 %v344
  %1275 = vmatpush1.msra.mxu0 %v343
  %1276 = vmatprep.subr.mxu0 %v347
  %1277 = vmatpush1.msra.mxu0 %v346
  %1278 = vmatprep.subr.mxu0 %v350
  %1279 = vmatpush1.msra.mxu0 %v349
  %1280 = vmatprep.subr.mxu0 %v353
  %1281 = vmatpush1.msra.mxu0 %v352
  %1282 = vmatprep.subr.mxu0 %v356
  %1283 = vmatpush1.msra.mxu0 %v355
  %1284 = vmatprep.subr.mxu0 %v359
  %1285 = vmatpush1.msra.mxu0 %v358
  %1286 = vmatprep.subr.mxu0 %v362
  %1287 = vmatpush1.msra.mxu0 %v361
  %1288 = vmatprep.subr.mxu0 %v365
  %1289 = vmatpush1.msra.mxu0 %v364
  %1290 = vmatprep.subr.mxu0 %v368
  %1291 = vmatpush1.msra.mxu0 %v367
  %1292 = vmatprep.subr.mxu0 %v371
  %1293 = vmatpush1.msra.mxu0 %v370
  %1294 = vmatprep.subr.mxu0 %v374
  %1295 = vmatpush1.msra.mxu0 %v373
  %1296 = vmatprep.subr.mxu0 %v377
  %1297 = vmatpush1.msra.mxu0 %v376
  %1298 = vmatprep.subr.mxu0 %v380
  %1299 = vmatpush1.msra.mxu0 %v379
  %1300 = vmatprep.subr.mxu0 %v383
  %1301 = vmatpush1.msra.mxu0 %v382
  %1302 = vmatprep.subr.mxu0 0.0
  %1303 = vmatpush1.msra.mxu0 0.0
  %1304 = vmatprep.subr.mxu0 0.0
  %1305 = vmatpush1.msra.mxu0 0.0
  %1306 = vmatprep.subr.mxu0 0.0
  %1307 = vmatpush1.msra.mxu0 0.0
  %1308 = vmatprep.subr.mxu0 0.0
  %1309 = vmatpush1.msra.mxu0 0.0
  %1310 = vmatprep.subr.mxu0 0.0
  %1311 = vmatpush1.msra.mxu0 0.0
  %1312 = vmatprep.subr.mxu0 0.0
  %1313 = vmatpush1.msra.mxu0 0.0
  %1314 = vmatprep.subr.mxu0 0.0
  %1315 = vmatpush1.msra.mxu0 0.0
  %1316 = vmatprep.subr.mxu0 0.0
  %1317 = vmatpush1.msra.mxu0 0.0
  %1318 = vmatprep.subr.mxu0 0.0
  %1319 = vmatpush1.msra.mxu0 0.0
  %1320 = vmatprep.subr.mxu0 0.0
  %1321 = vmatpush1.msra.mxu0 0.0
  %1322 = vmatprep.subr.mxu0 0.0
  %1323 = vmatpush1.msra.mxu0 0.0
  %1324 = vmatprep.subr.mxu0 0.0
  %1325 = vmatpush1.msra.mxu0 0.0
  %1326 = vmatprep.subr.mxu0 0.0
  %1327 = vmatpush1.msra.mxu0 0.0
  %1328 = vmatprep.subr.mxu0 0.0
  %1329 = vmatpush1.msra.mxu0 0.0
  %1330 = vmatprep.subr.mxu0 0.0
  %1331 = vmatpush1.msra.mxu0 0.0
  %1332 = vmatprep.subr.mxu0 0.0
  %1333 = vmatpush1.msra.mxu0 0.0
  %1334 = vmatprep.mubr.f32.mxu0 0.0
  %1335 = vmatmul.mubr.f32.gmra.mrb[0].mxu0 %v1265
  %v1336 = vpop.f32.mrb[0].mxu0
  %v1337 = vadd.f32 %v393, %v1336
  %v1338 = vpop.f32.mrb[0].mxu0
  %v1339 = vadd.f32 %v397, %v1338
  %1340 = vdwg.mxu0
  %1341 = vmatprep.subr.mxu0 0.0
  %1342 = vmatpush1.msra.mxu0 %v339
  %1343 = vmatprep.subr.mxu0 0.0
  %1344 = vmatpush1.msra.mxu0 %v342
  %1345 = vmatprep.subr.mxu0 0.0
  %1346 = vmatpush1.msra.mxu0 %v345
  %1347 = vmatprep.subr.mxu0 0.0
  %1348 = vmatpush1.msra.mxu0 %v348
  %1349 = vmatprep.subr.mxu0 0.0
  %1350 = vmatpush1.msra.mxu0 %v351
  %1351 = vmatprep.subr.mxu0 0.0
  %1352 = vmatpush1.msra.mxu0 %v354
  %1353 = vmatprep.subr.mxu0 0.0
  %1354 = vmatpush1.msra.mxu0 %v357
  %1355 = vmatprep.subr.mxu0 0.0
  %1356 = vmatpush1.msra.mxu0 %v360
  %1357 = vmatprep.subr.mxu0 0.0
  %1358 = vmatpush1.msra.mxu0 %v363
  %1359 = vmatprep.subr.mxu0 0.0
  %1360 = vmatpush1.msra.mxu0 %v366
  %1361 = vmatprep.subr.mxu0 0.0
  %1362 = vmatpush1.msra.mxu0 %v369
  %1363 = vmatprep.subr.mxu0 0.0
  %1364 = vmatpush1.msra.mxu0 %v372
  %1365 = vmatprep.subr.mxu0 0.0
  %1366 = vmatpush1.msra.mxu0 %v375
  %1367 = vmatprep.subr.mxu0 0.0
  %1368 = vmatpush1.msra.mxu0 %v378
  %1369 = vmatprep.subr.mxu0 0.0
  %1370 = vmatpush1.msra.mxu0 %v381
  %1371 = vmatprep.subr.mxu0 0.0
  %1372 = vmatpush1.msra.mxu0 %v384
  %1373 = vmatprep.subr.mxu0 0.0
  %1374 = vmatpush1.msra.mxu0 0.0
  %1375 = vmatprep.subr.mxu0 0.0
  %1376 = vmatpush1.msra.mxu0 0.0
  %1377 = vmatprep.subr.mxu0 0.0
  %1378 = vmatpush1.msra.mxu0 0.0
  %1379 = vmatprep.subr.mxu0 0.0
  %1380 = vmatpush1.msra.mxu0 0.0
  %1381 = vmatprep.subr.mxu0 0.0
  %1382 = vmatpush1.msra.mxu0 0.0
  %1383 = vmatprep.subr.mxu0 0.0
  %1384 = vmatpush1.msra.mxu0 0.0
  %1385 = vmatprep.subr.mxu0 0.0
  %1386 = vmatpush1.msra.mxu0 0.0
  %1387 = vmatprep.subr.mxu0 0.0
  %1388 = vmatpush1.msra.mxu0 0.0
  %1389 = vmatprep.subr.mxu0 0.0
  %1390 = vmatpush1.msra.mxu0 0.0
  %1391 = vmatprep.subr.mxu0 0.0
  %1392 = vmatpush1.msra.mxu0 0.0
  %1393 = vmatprep.subr.mxu0 0.0
  %1394 = vmatpush1.msra.mxu0 0.0
  %1395 = vmatprep.subr.mxu0 0.0
  %1396 = vmatpush1.msra.mxu0 0.0
  %1397 = vmatprep.subr.mxu0 0.0
  %1398 = vmatpush1.msra.mxu0 0.0
  %1399 = vmatprep.subr.mxu0 0.0
  %1400 = vmatpush1.msra.mxu0 0.0
  %1401 = vmatprep.subr.mxu0 0.0
  %1402 = vmatpush1.msra.mxu0 0.0
  %1403 = vmatprep.subr.mxu0 0.0
  %1404 = vmatpush1.msra.mxu0 0.0
  %1405 = vmatprep.mubr.f32.mxu0 0.0
  %1406 = vmatmul.mubr.f32.gmra.mrb[0].mxu0 %v1265
  %v1407 = vpop.f32.mrb[0].mxu0
  %v1408 = vadd.f32 %v401, %v1407
  %v1409 = vpop.f32.mrb[0].mxu0
  %1410 = vdwg.mxu0
  %v1411 = vadd.f32 %v1267, %v1337
  %v1412 = vxor.u32 %v1411, 2147483648
  %v1413 = vmul.f32 %v1412, 1.442695
  %v1414 = vpow.pop %v1413
  %v1415 = vadd.f32 %v1414, 1.0
  %v1416 = vrcp.pop %v1415
  %v1417 = vmul.f32 1.0, %v1416
  %v1418 = vadd.f32 %v1268, %v1339
  %v1419 = vxor.u32 %v1418, 2147483648
  %v1420 = vmul.f32 %v1419, 1.442695
  %v1421 = vpow.pop %v1420
  %v1422 = vadd.f32 %v1421, 1.0
  %v1423 = vrcp.pop %v1422
  %v1424 = vmul.f32 1.0, %v1423
  %v1425 = vmul.f32 %v1417, %v1408
  %v1426 = vadd.f32 %v1269, %v1425
  %v1427 = vtanh.pop %v1426
  %v1428 = vsub.f32 1.0, %v1424
  %v1429 = vmul.f32 %v1428, %v1427
  %v1430 = vmul.f32 %v1424, %v1265
  %v1431 = vadd.f32 %v1429, %v1430
  %vm1432 = vcmp.gt.s32.totalorder %v336, 5
  %v1433 = vsel %vm1432, 1, 0
  %1434 = vset.pattern.permute.xlu0 0
  %1435 = vperm.xlu0 %1434, %v1433
  %v1436 = vpop.permute.xlu0 %1435
  %vm1437 = vcmp.eq.s32.totalorder %v1436, 1
  %v1438 = vsel %vm1437, %v1431, %v1265
  %s1439 = scalar_lea.vmem [#allocation2], 144
  %v1440 = vld [vmem:[%s1439] sm:$0xff]
  %v1441 = vld [vmem:[%s1439 + $0x8] sm:$0xff]
  %v1442 = vld [vmem:[%s1439 + $0x10] sm:$0xff]
  %1443 = vmatprep.subr.mxu0 %v338
  %1444 = vmatpush1.msra.mxu0 %v337
  %1445 = vmatprep.subr.mxu0 %v341
  %1446 = vmatpush1.msra.mxu0 %v340
  %1447 = vmatprep.subr.mxu0 %v344
  %1448 = vmatpush1.msra.mxu0 %v343
  %1449 = vmatprep.subr.mxu0 %v347
  %1450 = vmatpush1.msra.mxu0 %v346
  %1451 = vmatprep.subr.mxu0 %v350
  %1452 = vmatpush1.msra.mxu0 %v349
  %1453 = vmatprep.subr.mxu0 %v353
  %1454 = vmatpush1.msra.mxu0 %v352
  %1455 = vmatprep.subr.mxu0 %v356
  %1456 = vmatpush1.msra.mxu0 %v355
  %1457 = vmatprep.subr.mxu0 %v359
  %1458 = vmatpush1.msra.mxu0 %v358
  %1459 = vmatprep.subr.mxu0 %v362
  %1460 = vmatpush1.msra.mxu0 %v361
  %1461 = vmatprep.subr.mxu0 %v365
  %1462 = vmatpush1.msra.mxu0 %v364
  %1463 = vmatprep.subr.mxu0 %v368
  %1464 = vmatpush1.msra.mxu0 %v367
  %1465 = vmatprep.subr.mxu0 %v371
  %1466 = vmatpush1.msra.mxu0 %v370
  %1467 = vmatprep.subr.mxu0 %v374
  %1468 = vmatpush1.msra.mxu0 %v373
  %1469 = vmatprep.subr.mxu0 %v377
  %1470 = vmatpush1.msra.mxu0 %v376
  %1471 = vmatprep.subr.mxu0 %v380
  %1472 = vmatpush1.msra.mxu0 %v379
  %1473 = vmatprep.subr.mxu0 %v383
  %1474 = vmatpush1.msra.mxu0 %v382
  %1475 = vmatprep.subr.mxu0 0.0
  %1476 = vmatpush1.msra.mxu0 0.0
  %1477 = vmatprep.subr.mxu0 0.0
  %1478 = vmatpush1.msra.mxu0 0.0
  %1479 = vmatprep.subr.mxu0 0.0
  %1480 = vmatpush1.msra.mxu0 0.0
  %1481 = vmatprep.subr.mxu0 0.0
  %1482 = vmatpush1.msra.mxu0 0.0
  %1483 = vmatprep.subr.mxu0 0.0
  %1484 = vmatpush1.msra.mxu0 0.0
  %1485 = vmatprep.subr.mxu0 0.0
  %1486 = vmatpush1.msra.mxu0 0.0
  %1487 = vmatprep.subr.mxu0 0.0
  %1488 = vmatpush1.msra.mxu0 0.0
  %1489 = vmatprep.subr.mxu0 0.0
  %1490 = vmatpush1.msra.mxu0 0.0
  %1491 = vmatprep.subr.mxu0 0.0
  %1492 = vmatpush1.msra.mxu0 0.0
  %1493 = vmatprep.subr.mxu0 0.0
  %1494 = vmatpush1.msra.mxu0 0.0
  %1495 = vmatprep.subr.mxu0 0.0
  %1496 = vmatpush1.msra.mxu0 0.0
  %1497 = vmatprep.subr.mxu0 0.0
  %1498 = vmatpush1.msra.mxu0 0.0
  %1499 = vmatprep.subr.mxu0 0.0
  %1500 = vmatpush1.msra.mxu0 0.0
  %1501 = vmatprep.subr.mxu0 0.0
  %1502 = vmatpush1.msra.mxu0 0.0
  %1503 = vmatprep.subr.mxu0 0.0
  %1504 = vmatpush1.msra.mxu0 0.0
  %1505 = vmatprep.subr.mxu0 0.0
  %1506 = vmatpush1.msra.mxu0 0.0
  %1507 = vmatprep.mubr.f32.mxu0 0.0
  %1508 = vmatmul.mubr.f32.gmra.mrb[0].mxu0 %v1438
  %v1509 = vpop.f32.mrb[0].mxu0
  %v1510 = vadd.f32 %v393, %v1509
  %v1511 = vpop.f32.mrb[0].mxu0
  %v1512 = vadd.f32 %v397, %v1511
  %1513 = vdwg.mxu0
  %1514 = vmatprep.subr.mxu0 0.0
  %1515 = vmatpush1.msra.mxu0 %v339
  %1516 = vmatprep.subr.mxu0 0.0
  %1517 = vmatpush1.msra.mxu0 %v342
  %1518 = vmatprep.subr.mxu0 0.0
  %1519 = vmatpush1.msra.mxu0 %v345
  %1520 = vmatprep.subr.mxu0 0.0
  %1521 = vmatpush1.msra.mxu0 %v348
  %1522 = vmatprep.subr.mxu0 0.0
  %1523 = vmatpush1.msra.mxu0 %v351
  %1524 = vmatprep.subr.mxu0 0.0
  %1525 = vmatpush1.msra.mxu0 %v354
  %1526 = vmatprep.subr.mxu0 0.0
  %1527 = vmatpush1.msra.mxu0 %v357
  %1528 = vmatprep.subr.mxu0 0.0
  %1529 = vmatpush1.msra.mxu0 %v360
  %1530 = vmatprep.subr.mxu0 0.0
  %1531 = vmatpush1.msra.mxu0 %v363
  %1532 = vmatprep.subr.mxu0 0.0
  %1533 = vmatpush1.msra.mxu0 %v366
  %1534 = vmatprep.subr.mxu0 0.0
  %1535 = vmatpush1.msra.mxu0 %v369
  %1536 = vmatprep.subr.mxu0 0.0
  %1537 = vmatpush1.msra.mxu0 %v372
  %1538 = vmatprep.subr.mxu0 0.0
  %1539 = vmatpush1.msra.mxu0 %v375
  %1540 = vmatprep.subr.mxu0 0.0
  %1541 = vmatpush1.msra.mxu0 %v378
  %1542 = vmatprep.subr.mxu0 0.0
  %1543 = vmatpush1.msra.mxu0 %v381
  %1544 = vmatprep.subr.mxu0 0.0
  %1545 = vmatpush1.msra.mxu0 %v384
  %1546 = vmatprep.subr.mxu0 0.0
  %1547 = vmatpush1.msra.mxu0 0.0
  %1548 = vmatprep.subr.mxu0 0.0
  %1549 = vmatpush1.msra.mxu0 0.0
  %1550 = vmatprep.subr.mxu0 0.0
  %1551 = vmatpush1.msra.mxu0 0.0
  %1552 = vmatprep.subr.mxu0 0.0
  %1553 = vmatpush1.msra.mxu0 0.0
  %1554 = vmatprep.subr.mxu0 0.0
  %1555 = vmatpush1.msra.mxu0 0.0
  %1556 = vmatprep.subr.mxu0 0.0
  %1557 = vmatpush1.msra.mxu0 0.0
  %1558 = vmatprep.subr.mxu0 0.0
  %1559 = vmatpush1.msra.mxu0 0.0
  %1560 = vmatprep.subr.mxu0 0.0
  %1561 = vmatpush1.msra.mxu0 0.0
  %1562 = vmatprep.subr.mxu0 0.0
  %1563 = vmatpush1.msra.mxu0 0.0
  %1564 = vmatprep.subr.mxu0 0.0
  %1565 = vmatpush1.msra.mxu0 0.0
  %1566 = vmatprep.subr.mxu0 0.0
  %1567 = vmatpush1.msra.mxu0 0.0
  %1568 = vmatprep.subr.mxu0 0.0
  %1569 = vmatpush1.msra.mxu0 0.0
  %1570 = vmatprep.subr.mxu0 0.0
  %1571 = vmatpush1.msra.mxu0 0.0
  %1572 = vmatprep.subr.mxu0 0.0
  %1573 = vmatpush1.msra.mxu0 0.0
  %1574 = vmatprep.subr.mxu0 0.0
  %1575 = vmatpush1.msra.mxu0 0.0
  %1576 = vmatprep.subr.mxu0 0.0
  %1577 = vmatpush1.msra.mxu0 0.0
  %1578 = vmatprep.mubr.f32.mxu0 0.0
  %1579 = vmatmul.mubr.f32.gmra.mrb[0].mxu0 %v1438
  %v1580 = vpop.f32.mrb[0].mxu0
  %v1581 = vadd.f32 %v401, %v1580
  %v1582 = vpop.f32.mrb[0].mxu0
  %1583 = vdwg.mxu0
  %v1584 = vadd.f32 %v1440, %v1510
  %v1585 = vxor.u32 %v1584, 2147483648
  %v1586 = vmul.f32 %v1585, 1.442695
  %v1587 = vpow.pop %v1586
  %v1588 = vadd.f32 %v1587, 1.0
  %v1589 = vrcp.pop %v1588
  %v1590 = vmul.f32 1.0, %v1589
  %v1591 = vadd.f32 %v1441, %v1512
  %v1592 = vxor.u32 %v1591, 2147483648
  %v1593 = vmul.f32 %v1592, 1.442695
  %v1594 = vpow.pop %v1593
  %v1595 = vadd.f32 %v1594, 1.0
  %v1596 = vrcp.pop %v1595
  %v1597 = vmul.f32 1.0, %v1596
  %v1598 = vmul.f32 %v1590, %v1581
  %v1599 = vadd.f32 %v1442, %v1598
  %v1600 = vtanh.pop %v1599
  %v1601 = vsub.f32 1.0, %v1597
  %v1602 = vmul.f32 %v1601, %v1600
  %v1603 = vmul.f32 %v1597, %v1438
  %v1604 = vadd.f32 %v1602, %v1603
  %vm1605 = vcmp.gt.s32.totalorder %v336, 6
  %v1606 = vsel %vm1605, 1, 0
  %1607 = vset.pattern.permute.xlu0 0
  %1608 = vperm.xlu0 %1607, %v1606
  %v1609 = vpop.permute.xlu0 %1608
  %vm1610 = vcmp.eq.s32.totalorder %v1609, 1
  %v1611 = vsel %vm1610, %v1604, %v1438
  %s1612 = scalar_lea.vmem [#allocation2], 168
  %v1613 = vld [vmem:[%s1612] sm:$0xff]
  %v1614 = vld [vmem:[%s1612 + $0x8] sm:$0xff]
  %v1615 = vld [vmem:[%s1612 + $0x10] sm:$0xff]
  %1616 = vmatprep.subr.mxu0 %v338
  %1617 = vmatpush1.msra.mxu0 %v337
  %1618 = vmatprep.subr.mxu0 %v341
  %1619 = vmatpush1.msra.mxu0 %v340
  %1620 = vmatprep.subr.mxu0 %v344
  %1621 = vmatpush1.msra.mxu0 %v343
  %1622 = vmatprep.subr.mxu0 %v347
  %1623 = vmatpush1.msra.mxu0 %v346
  %1624 = vmatprep.subr.mxu0 %v350
  %1625 = vmatpush1.msra.mxu0 %v349
  %1626 = vmatprep.subr.mxu0 %v353
  %1627 = vmatpush1.msra.mxu0 %v352
  %1628 = vmatprep.subr.mxu0 %v356
  %1629 = vmatpush1.msra.mxu0 %v355
  %1630 = vmatprep.subr.mxu0 %v359
  %1631 = vmatpush1.msra.mxu0 %v358
  %1632 = vmatprep.subr.mxu0 %v362
  %1633 = vmatpush1.msra.mxu0 %v361
  %1634 = vmatprep.subr.mxu0 %v365
  %1635 = vmatpush1.msra.mxu0 %v364
  %1636 = vmatprep.subr.mxu0 %v368
  %1637 = vmatpush1.msra.mxu0 %v367
  %1638 = vmatprep.subr.mxu0 %v371
  %1639 = vmatpush1.msra.mxu0 %v370
  %1640 = vmatprep.subr.mxu0 %v374
  %1641 = vmatpush1.msra.mxu0 %v373
  %1642 = vmatprep.subr.mxu0 %v377
  %1643 = vmatpush1.msra.mxu0 %v376
  %1644 = vmatprep.subr.mxu0 %v380
  %1645 = vmatpush1.msra.mxu0 %v379
  %1646 = vmatprep.subr.mxu0 %v383
  %1647 = vmatpush1.msra.mxu0 %v382
  %1648 = vmatprep.subr.mxu0 0.0
  %1649 = vmatpush1.msra.mxu0 0.0
  %1650 = vmatprep.subr.mxu0 0.0
  %1651 = vmatpush1.msra.mxu0 0.0
  %1652 = vmatprep.subr.mxu0 0.0
  %1653 = vmatpush1.msra.mxu0 0.0
  %1654 = vmatprep.subr.mxu0 0.0
  %1655 = vmatpush1.msra.mxu0 0.0
  %1656 = vmatprep.subr.mxu0 0.0
  %1657 = vmatpush1.msra.mxu0 0.0
  %1658 = vmatprep.subr.mxu0 0.0
  %1659 = vmatpush1.msra.mxu0 0.0
  %1660 = vmatprep.subr.mxu0 0.0
  %1661 = vmatpush1.msra.mxu0 0.0
  %1662 = vmatprep.subr.mxu0 0.0
  %1663 = vmatpush1.msra.mxu0 0.0
  %1664 = vmatprep.subr.mxu0 0.0
  %1665 = vmatpush1.msra.mxu0 0.0
  %1666 = vmatprep.subr.mxu0 0.0
  %1667 = vmatpush1.msra.mxu0 0.0
  %1668 = vmatprep.subr.mxu0 0.0
  %1669 = vmatpush1.msra.mxu0 0.0
  %1670 = vmatprep.subr.mxu0 0.0
  %1671 = vmatpush1.msra.mxu0 0.0
  %1672 = vmatprep.subr.mxu0 0.0
  %1673 = vmatpush1.msra.mxu0 0.0
  %1674 = vmatprep.subr.mxu0 0.0
  %1675 = vmatpush1.msra.mxu0 0.0
  %1676 = vmatprep.subr.mxu0 0.0
  %1677 = vmatpush1.msra.mxu0 0.0
  %1678 = vmatprep.subr.mxu0 0.0
  %1679 = vmatpush1.msra.mxu0 0.0
  %1680 = vmatprep.mubr.f32.mxu0 0.0
  %1681 = vmatmul.mubr.f32.gmra.mrb[0].mxu0 %v1611
  %v1682 = vpop.f32.mrb[0].mxu0
  %v1683 = vadd.f32 %v393, %v1682
  %v1684 = vpop.f32.mrb[0].mxu0
  %v1685 = vadd.f32 %v397, %v1684
  %1686 = vdwg.mxu0
  %1687 = vmatprep.subr.mxu0 0.0
  %1688 = vmatpush1.msra.mxu0 %v339
  %1689 = vmatprep.subr.mxu0 0.0
  %1690 = vmatpush1.msra.mxu0 %v342
  %1691 = vmatprep.subr.mxu0 0.0
  %1692 = vmatpush1.msra.mxu0 %v345
  %1693 = vmatprep.subr.mxu0 0.0
  %1694 = vmatpush1.msra.mxu0 %v348
  %1695 = vmatprep.subr.mxu0 0.0
  %1696 = vmatpush1.msra.mxu0 %v351
  %1697 = vmatprep.subr.mxu0 0.0
  %1698 = vmatpush1.msra.mxu0 %v354
  %1699 = vmatprep.subr.mxu0 0.0
  %1700 = vmatpush1.msra.mxu0 %v357
  %1701 = vmatprep.subr.mxu0 0.0
  %1702 = vmatpush1.msra.mxu0 %v360
  %1703 = vmatprep.subr.mxu0 0.0
  %1704 = vmatpush1.msra.mxu0 %v363
  %1705 = vmatprep.subr.mxu0 0.0
  %1706 = vmatpush1.msra.mxu0 %v366
  %1707 = vmatprep.subr.mxu0 0.0
  %1708 = vmatpush1.msra.mxu0 %v369
  %1709 = vmatprep.subr.mxu0 0.0
  %1710 = vmatpush1.msra.mxu0 %v372
  %1711 = vmatprep.subr.mxu0 0.0
  %1712 = vmatpush1.msra.mxu0 %v375
  %1713 = vmatprep.subr.mxu0 0.0
  %1714 = vmatpush1.msra.mxu0 %v378
  %1715 = vmatprep.subr.mxu0 0.0
  %1716 = vmatpush1.msra.mxu0 %v381
  %1717 = vmatprep.subr.mxu0 0.0
  %1718 = vmatpush1.msra.mxu0 %v384
  %1719 = vmatprep.subr.mxu0 0.0
  %1720 = vmatpush1.msra.mxu0 0.0
  %1721 = vmatprep.subr.mxu0 0.0
  %1722 = vmatpush1.msra.mxu0 0.0
  %1723 = vmatprep.subr.mxu0 0.0
  %1724 = vmatpush1.msra.mxu0 0.0
  %1725 = vmatprep.subr.mxu0 0.0
  %1726 = vmatpush1.msra.mxu0 0.0
  %1727 = vmatprep.subr.mxu0 0.0
  %1728 = vmatpush1.msra.mxu0 0.0
  %1729 = vmatprep.subr.mxu0 0.0
  %1730 = vmatpush1.msra.mxu0 0.0
  %1731 = vmatprep.subr.mxu0 0.0
  %1732 = vmatpush1.msra.mxu0 0.0
  %1733 = vmatprep.subr.mxu0 0.0
  %1734 = vmatpush1.msra.mxu0 0.0
  %1735 = vmatprep.subr.mxu0 0.0
  %1736 = vmatpush1.msra.mxu0 0.0
  %1737 = vmatprep.subr.mxu0 0.0
  %1738 = vmatpush1.msra.mxu0 0.0
  %1739 = vmatprep.subr.mxu0 0.0
  %1740 = vmatpush1.msra.mxu0 0.0
  %1741 = vmatprep.subr.mxu0 0.0
  %1742 = vmatpush1.msra.mxu0 0.0
  %1743 = vmatprep.subr.mxu0 0.0
  %1744 = vmatpush1.msra.mxu0 0.0
  %1745 = vmatprep.subr.mxu0 0.0
  %1746 = vmatpush1.msra.mxu0 0.0
  %1747 = vmatprep.subr.mxu0 0.0
  %1748 = vmatpush1.msra.mxu0 0.0
  %1749 = vmatprep.subr.mxu0 0.0
  %1750 = vmatpush1.msra.mxu0 0.0
  %1751 = vmatprep.mubr.f32.mxu0 0.0
  %1752 = vmatmul.mubr.f32.gmra.mrb[0].mxu0 %v1611
  %v1753 = vpop.f32.mrb[0].mxu0
  %v1754 = vadd.f32 %v401, %v1753
  %v1755 = vpop.f32.mrb[0].mxu0
  %1756 = vdwg.mxu0
  %v1757 = vadd.f32 %v1613, %v1683
  %v1758 = vxor.u32 %v1757, 2147483648
  %v1759 = vmul.f32 %v1758, 1.442695
  %v1760 = vpow.pop %v1759
  %v1761 = vadd.f32 %v1760, 1.0
  %v1762 = vrcp.pop %v1761
  %v1763 = vmul.f32 1.0, %v1762
  %v1764 = vadd.f32 %v1614, %v1685
  %v1765 = vxor.u32 %v1764, 2147483648
  %v1766 = vmul.f32 %v1765, 1.442695
  %v1767 = vpow.pop %v1766
  %v1768 = vadd.f32 %v1767, 1.0
  %v1769 = vrcp.pop %v1768
  %v1770 = vmul.f32 1.0, %v1769
  %v1771 = vmul.f32 %v1763, %v1754
  %v1772 = vadd.f32 %v1615, %v1771
  %v1773 = vtanh.pop %v1772
  %v1774 = vsub.f32 1.0, %v1770
  %v1775 = vmul.f32 %v1774, %v1773
  %v1776 = vmul.f32 %v1770, %v1611
  %v1777 = vadd.f32 %v1775, %v1776
  %vm1778 = vcmp.gt.s32.totalorder %v336, 7
  %v1779 = vsel %vm1778, 1, 0
  %1780 = vset.pattern.permute.xlu0 0
  %1781 = vperm.xlu0 %1780, %v1779
  %v1782 = vpop.permute.xlu0 %1781
  %vm1783 = vcmp.eq.s32.totalorder %v1782, 1
  %v1784 = vsel %vm1783, %v1777, %v1611
  %v1785 = vld [vmem:[%s7] sm:$0xff]
  %v1786 = vld [vmem:[%s7 + $0x8] sm:$0xff]
  %v1787 = vld [vmem:[%s7 + $0x10] sm:$0xff]
  %v1788 = vld [vmem:[%s7 + $0x18] sm:$0xff]
  %v1789 = vld [vmem:[%s7 + $0x20] sm:$0xff]
  %v1790 = vld [vmem:[%s7 + $0x28] sm:$0xff]
  %v1791 = vld [vmem:[%s7 + $0x30] sm:$0xff]
  %v1792 = vld [vmem:[%s7 + $0x38] sm:$0xff]
  %v1793 = vld [vmem:[%s7 + $0x40] sm:$0xff]
  %v1794 = vld [vmem:[%s7 + $0x48] sm:$0xff]
  %v1795 = vld [vmem:[%s7 + $0x50] sm:$0xff]
  %v1796 = vld [vmem:[%s7 + $0x58] sm:$0xff]
  %v1797 = vld [vmem:[%s7 + $0x60] sm:$0xff]
  %v1798 = vld [vmem:[%s7 + $0x68] sm:$0xff]
  %v1799 = vld [vmem:[%s7 + $0x70] sm:$0xff]
  %v1800 = vld [vmem:[%s7 + $0x78] sm:$0xff]
  %v1801 = vld [vmem:[%s7 + $0x80] sm:$0xff]
  %v1802 = vld [vmem:[%s7 + $0x88] sm:$0xff]
  %v1803 = vld [vmem:[%s7 + $0x90] sm:$0xff]
  %v1804 = vld [vmem:[%s7 + $0x98] sm:$0xff]
  %v1805 = vld [vmem:[%s7 + $0xa0] sm:$0xff]
  %v1806 = vld [vmem:[%s7 + $0xa8] sm:$0xff]
  %v1807 = vld [vmem:[%s7 + $0xb0] sm:$0xff]
  %v1808 = vld [vmem:[%s7 + $0xb8] sm:$0xff]
  %v1809 = vld [vmem:[%s7 + $0xc0] sm:$0xff]
  %v1810 = vld [vmem:[%s7 + $0xc8] sm:$0xff]
  %v1811 = vld [vmem:[%s7 + $0xd0] sm:$0xff]
  %v1812 = vld [vmem:[%s7 + $0xd8] sm:$0xff]
  %v1813 = vld [vmem:[%s7 + $0xe0] sm:$0xff]
  %v1814 = vld [vmem:[%s7 + $0xe8] sm:$0xff]
  %v1815 = vld [vmem:[%s7 + $0xf0] sm:$0xff]
  %v1816 = vld [vmem:[%s7 + $0xf8] sm:$0xff]
  %v1817 = vld [vmem:[%s8] sm:$0x3]
  %v1819 = vlaneseq
  %v1820 = vshrl.u32 %v1819, 7
  %v1821 = vsub.s32 0, %v1820
  %v1822 = vrot.slane %v1817, %v1821
  %v1823 = vlaneseq
  %v1824 = vshrl.u32 %v1823, 7
  %v1825 = vsub.s32 1, %v1824
  %v1826 = vrot.slane %v1817, %v1825
  %1829 = vmatprep.subr.mxu0 %v1786
  %1830 = vmatpush1.msra.mxu0 %v1785
  %1831 = vmatprep.subr.mxu0 %v1788
  %1832 = vmatpush1.msra.mxu0 %v1787
  %1833 = vmatprep.subr.mxu0 %v1790
  %1834 = vmatpush1.msra.mxu0 %v1789
  %1835 = vmatprep.subr.mxu0 %v1792
  %1836 = vmatpush1.msra.mxu0 %v1791
  %1837 = vmatprep.subr.mxu0 %v1794
  %1838 = vmatpush1.msra.mxu0 %v1793
  %1839 = vmatprep.subr.mxu0 %v1796
  %1840 = vmatpush1.msra.mxu0 %v1795
  %1841 = vmatprep.subr.mxu0 %v1798
  %1842 = vmatpush1.msra.mxu0 %v1797
  %1843 = vmatprep.subr.mxu0 %v1800
  %1844 = vmatpush1.msra.mxu0 %v1799
  %1845 = vmatprep.subr.mxu0 %v1802
  %1846 = vmatpush1.msra.mxu0 %v1801
  %1847 = vmatprep.subr.mxu0 %v1804
  %1848 = vmatpush1.msra.mxu0 %v1803
  %1849 = vmatprep.subr.mxu0 %v1806
  %1850 = vmatpush1.msra.mxu0 %v1805
  %1851 = vmatprep.subr.mxu0 %v1808
  %1852 = vmatpush1.msra.mxu0 %v1807
  %1853 = vmatprep.subr.mxu0 %v1810
  %1854 = vmatpush1.msra.mxu0 %v1809
  %1855 = vmatprep.subr.mxu0 %v1812
  %1856 = vmatpush1.msra.mxu0 %v1811
  %1857 = vmatprep.subr.mxu0 %v1814
  %1858 = vmatpush1.msra.mxu0 %v1813
  %1859 = vmatprep.subr.mxu0 %v1816
  %1860 = vmatpush1.msra.mxu0 %v1815
  %1861 = vmatprep.subr.mxu0 0.0
  %1862 = vmatpush1.msra.mxu0 0.0
  %1863 = vmatprep.subr.mxu0 0.0
  %1864 = vmatpush1.msra.mxu0 0.0
  %1865 = vmatprep.subr.mxu0 0.0
  %1866 = vmatpush1.msra.mxu0 0.0
  %1867 = vmatprep.subr.mxu0 0.0
  %1868 = vmatpush1.msra.mxu0 0.0
  %1869 = vmatprep.subr.mxu0 0.0
  %1870 = vmatpush1.msra.mxu0 0.0
  %1871 = vmatprep.subr.mxu0 0.0
  %1872 = vmatpush1.msra.mxu0 0.0
  %1873 = vmatprep.subr.mxu0 0.0
  %1874 = vmatpush1.msra.mxu0 0.0
  %1875 = vmatprep.subr.mxu0 0.0
  %1876 = vmatpush1.msra.mxu0 0.0
  %1877 = vmatprep.subr.mxu0 0.0
  %1878 = vmatpush1.msra.mxu0 0.0
  %1879 = vmatprep.subr.mxu0 0.0
  %1880 = vmatpush1.msra.mxu0 0.0
  %1881 = vmatprep.subr.mxu0 0.0
  %1882 = vmatpush1.msra.mxu0 0.0
  %1883 = vmatprep.subr.mxu0 0.0
  %1884 = vmatpush1.msra.mxu0 0.0
  %1885 = vmatprep.subr.mxu0 0.0
  %1886 = vmatpush1.msra.mxu0 0.0
  %1887 = vmatprep.subr.mxu0 0.0
  %1888 = vmatpush1.msra.mxu0 0.0
  %1889 = vmatprep.subr.mxu0 0.0
  %1890 = vmatpush1.msra.mxu0 0.0
  %1891 = vmatprep.subr.mxu0 0.0
  %1892 = vmatpush1.msra.mxu0 0.0
  %1893 = vmatprep.mubr.f32.mxu0 0.0
  %1894 = vmatmul.mubr.f32.gmra.mrb[0].mxu0 %v1784
  %v1895 = vpop.f32.mrb[0].mxu0
  %v1896 = vadd.f32 %v1822, %v1895
  %v1897 = vpop.f32.mrb[0].mxu0
  %v1898 = vadd.f32 %v1826, %v1897
  %1899 = vdwg.mxu0
  %v1900 = vld [vmem:[%s2] sm:$0xff]
  %v1901 = vlaneseq
  %v1902 = vand.u32 %v1901, 127
  %vm1903 = vcmp.lt.s32.totalorder %v1902, 4
  %vm1904 = vcmp.lt.s32.totalorder %v1902, 8
  %vm1905 = vmxor %vm1903, 1
  %vm1906 = vcmp.eq.f32.partialorder %v1900, 0.0
  %vm1907 = vmor %vm1905, %vm1906
  %v1908 = vsel %vm1907, -100000.0, %v1896
  %vm1909 = vcmp.ne.f32.partialorder %v1908, -100000.0
  %vm1910 = vmand %vm1903, %vm1909
  %v1911 = vsel %vm1910, 1.0, 0.0
  %1912 = vmax.xlane.f32.xlu0 %v1911
  %v1913 = vpop.xlane.xlu0 %1912
  %vm1914 = vcmp.gt.f32.partialorder %v1913, 0.0
  %vm1915 = vmxor %vm1914, 1
  %v1916 = vsel %vm1915, 1, 0
  %vm1917 = vcmp.eq.s32.totalorder %v1916, 1
  %vm1918 = vmand %vm1917, %vm1903
  %v1919 = vsel %vm1918, 0.0, %v1908
  %1921 = vrot.lane.b32.xlu0 %v1900, 127
  %v1922 = vpop.permute.xlu0 %1921
  %v1924 = vadd.f32 %v1900, %v1922
  %v1925 = vmul.f32 %v1924, 0.5
  %v1926 = vld [vmem:[%s9] sm:$0x1]
  %v1928 = vlaneseq
  %v1929 = vshrl.u32 %v1928, 7
  %v1930 = vsub.s32 0, %v1929
  %v1931 = vrot.slane %v1926, %v1930
  %1933 = vset.pattern.permute.xlu0 6
  %1934 = vperm.xlu0 %1933, %v1900
  %v1935 = vpop.permute.xlu0 %1934
  %v1937 = vmul.f32 %v1931, %v1935
  %vm1938 = vcmp.eq.s32.totalorder %v1902, 0
  %vm1939 = vcmp.eq.s32.totalorder %v1902, 1
  %vm1940 = vcmp.eq.s32.totalorder %v1902, 2
  %1941 = vset.pattern.permute.xlu0 5
  %1942 = vperm.xlu0 %1941, %v1900
  %v1943 = vpop.permute.xlu0 %1942
  %v1945 = vsel %vm1940, %v1943, %v1937
  %1947 = vset.pattern.permute.xlu0 4
  %1948 = vperm.xlu0 %1947, %v1925
  %v1949 = vpop.permute.xlu0 %1948
  %v1951 = vsel %vm1939, %v1949, %v1945
  %1952 = vset.pattern.permute.xlu0 4
  %1953 = vperm.xlu0 %1952, %v1900
  %v1954 = vpop.permute.xlu0 %1953
  %v1956 = vsel %vm1938, %v1954, %v1951
  %vm1957 = vmxor %vm1904, 1
  %vm1958 = vcmp.gt.f32.partialorder %v1954, %v1956
  %vm1959 = vmor %vm1957, %vm1958
  %vm1960 = vcmp.lt.f32.partialorder %v1943, %v1956
  %vm1961 = vmor %vm1959, %vm1960
  %v1962 = vsel %vm1961, -100000.0, %v1898
  %vm1963 = vcmp.ne.f32.partialorder %v1962, -100000.0
  %vm1964 = vmand %vm1904, %vm1963
  %v1965 = vsel %vm1964, 1.0, 0.0
  %1966 = vmax.xlane.f32.xlu0 %v1965
  %v1967 = vpop.xlane.xlu0 %1966
  %vm1968 = vcmp.gt.f32.partialorder %v1967, 0.0
  %vm1969 = vmxor %vm1968, 1
  %v1970 = vsel %vm1969, 1, 0
  %vm1971 = vcmp.eq.s32.totalorder %v1970, 1
  %vm1972 = vmand %vm1971, %vm1904
  %v1973 = vsel %vm1972, 0.0, %v1962
  %v1974 = vsel %vm1906, 1, 0
  %1975 = vset.pattern.permute.xlu0 2
  %1976 = vperm.xlu0 %1975, %v1974
  %v1977 = vpop.permute.xlu0 %1976
  %vm1978 = vcmp.eq.s32.totalorder %v1977, 1
  %v1979 = vsel %vm1978, -100000.0, %v1973
  %v1980 = vsel %vm1903, %v1919, -100000.0
  %1981 = vmax.xlane.f32.xlu0 %v1980
  %v1982 = vpop.xlane.xlu0 %1981
  %v1983 = vsub.f32 %v1919, %v1982
  %v1984 = vsel %vm1903, %v1983, -100000.0
  %v1985 = vmul.f32 %v1984, 1.442695
  %v1986 = vpow.pop %v1985
  %1987 = vadd.xlane.f32.xlu0 %v1986
  %v1988 = vpop.xlane.xlu0 %1987
  %v1989 = vlog2.pop %v1988
  %v1990 = vmul.f32 %v1989, 0.6931472
  %v1991 = vsub.f32 %v1983, %v1990
  %1992 = vst [vmem:[%s10] sm:$0xff] %v1991
  %v1993 = vsel %vm1904, %v1979, -100000.0
  %1994 = vmax.xlane.f32.xlu0 %v1993
  %v1995 = vpop.xlane.xlu0 %1994
  %v1996 = vsub.f32 %v1979, %v1995
  %v1997 = vsel %vm1904, %v1996, -100000.0
  %v1998 = vmul.f32 %v1997, 1.442695
  %v1999 = vpow.pop %v1998
  %2000 = vadd.xlane.f32.xlu0 %v1999
  %v2001 = vpop.xlane.xlu0 %2000
  %v2002 = vlog2.pop %v2001
  %v2003 = vmul.f32 %v2002, 0.6931472
  %v2004 = vsub.f32 %v1996, %v2003
  %2005 = vst [vmem:[%s10 + $0x8] sm:$0xff] %v2004
  // Predicated region
  $region42: #{policy_forward.1} parent=0 // pred_check
    _
  $region43: #{policy_forward.1} parent=0 // pred_check_branch
    %2007 = sbr.rel (0) target = $region45
  $region44: #{policy_forward.1} parent=0 // pred_region
    _
  $region45: #{policy_forward.1} parent=0 // pred_fallthru
    _
  // Predicated region
  $region46: #{policy_forward.1} parent=0 // pred_check
    _
  $region47: #{policy_forward.1} parent=0 // pred_check_branch
    %2009 = sbr.rel (0) target = $region49
  $region48: #{policy_forward.1} parent=0 // pred_region
    _
  $region49: #{policy_forward.1} parent=0 // pred_fallthru
    _

</llo_original>
